<compile_context>
chip_gen: v7x
topology: tpu7x:2x2x1
jax: 0.10.0
libtpu: 0.0.40
codegen_flags: <defaults>
</compile_context>

<pallas_src>
import functools

import jax
import jax.numpy as jnp
from jax import lax
from jax.experimental import pallas as pl
from jax.experimental.pallas import tpu as pltpu


def _round_up(n, m):
    return ((n + m - 1) // m) * m


def _pick_hw_tile(hw, target):
    """Largest multiple of 128 <= target that divides hw; fall back to full hw."""
    if hw % 128 == 0:
        t = min(target, hw)
        t -= t % 128
        while t >= 128 and hw % t != 0:
            t -= 128
        if t >= 128 and hw % t == 0:
            return t
    return hw


def _self_transformer_kernel(x_ref,                       # (1, Cp, Thw) f32, channel-major
                             wq_ref, wk_ref, wv_ref, wo_ref,   # (Cp, Cp) bf16
                             bq_ref, bk_ref, bv_ref,           # (Cp, 1)  f32 (folded LN bias)
                             scale_ref, nbias_ref,             # (Cp, Cp) f32 head temp / mask
                             o_ref,                             # (1, Cp, Thw) f32
                             gram_acc, qss_acc, kss_acc, attn_vmem,   # VMEM scratch
                             *, inv_c):
    p = pl.program_id(1)          # phase: 0 = accumulate Gram/norms, 1 = apply attention
    t = pl.program_id(2)          # HW tile index

    x = x_ref[0]                                      # (Cp, Thw) f32
    # WithBias LayerNorm over the true channel count C (padded channel rows are zero,
    # so sums over Cp == sums over C; E[x^2] - mu^2 keeps the zero padding harmless).
    s1 = jnp.sum(x, axis=0, keepdims=True)            # (1, Thw)
    s2 = jnp.sum(x * x, axis=0, keepdims=True)
    mu = s1 * inv_c
    var = s2 * inv_c - mu * mu
    # LN affine (ln_w, ln_b) is folded into the projection weights / biases.
    y = ((x - mu) * lax.rsqrt(var + 1e-5)).astype(jnp.bfloat16)   # (Cp, Thw) bf16

    @pl.when(p == 0)
    def _accumulate():
        @pl.when(t == 0)
        def _init():
            gram_acc[...] = jnp.zeros_like(gram_acc)
            qss_acc[...] = jnp.zeros_like(qss_acc)
            kss_acc[...] = jnp.zeros_like(kss_acc)

        q = jnp.dot(wq_ref[...], y, preferred_element_type=jnp.float32) + bq_ref[...]
        k = jnp.dot(wk_ref[...], y, preferred_element_type=jnp.float32) + bk_ref[...]

        # per-channel squared L2 norms over HW: q as a (Cp,1) column (natural lane
        # reduce), k as a lane-dense (1,Cp) row via a tiny ones-vector matmul so the
        # later column scaling of the Gram is a plain broadcast (no vector transpose).
        qss_acc[...] += jnp.sum(q * q, axis=1, keepdims=True)
        kk = k * k
        kss_acc[...] += lax.dot_general(
            jnp.ones((1, kk.shape[1]), jnp.float32), kk,
            (((1,), (1,)), ((), ())), preferred_element_type=jnp.float32)

        # full-C unnormalized Gram: G[i, j] = sum_hw q[i, hw] * k[j, hw]  (f32 accumulate)
        gram_acc[...] += lax.dot_general(q, k, (((1,), (1,)), ((), ())),
                                         preferred_element_type=jnp.float32)

        # Keep the (single, revisited) output buffer initialized; it is fully
        # overwritten in phase 1 before the block is ever written back to HBM.
        o_ref[0] = x

    @pl.when(p == 1)
    def _apply():
        @pl.when(t == 0)
        def _build_attn():
            # F.normalize(dim=-1): scale Gram rows / cols by 1 / max(||.||_2, 1e-12).
            inv_q = pl.reciprocal(jnp.maximum(jnp.sqrt(qss_acc[...]), 1e-12),
                                  approx=True)                       # (Cp, 1)
            inv_k = pl.reciprocal(jnp.maximum(jnp.sqrt(kss_acc[...]), 1e-12),
                                  approx=True)                       # (1, Cp)
            # per-head temperature (scale_ref) + block-diagonal head mask (nbias_ref)
            logits = gram_acc[...] * inv_q * inv_k * scale_ref[...] + nbias_ref[...]
            m = jnp.max(logits, axis=-1, keepdims=True)
            e = jnp.exp(logits - m)
            attn_vmem[...] = e * pl.reciprocal(jnp.sum(e, axis=-1, keepdims=True),
                                               approx=True)

        v = jnp.dot(wv_ref[...], y, preferred_element_type=jnp.float32) + bv_ref[...]
        o = jnp.dot(attn_vmem[...].astype(jnp.bfloat16), v.astype(jnp.bfloat16),
                    preferred_element_type=jnp.float32)               # (Cp, Thw)
        proj = jnp.dot(wo_ref[...], o.astype(jnp.bfloat16),
                       preferred_element_type=jnp.float32)
        o_ref[0] = x + proj                                           # residual


def self_transformer(x_nchw, params, num_heads, *, hw_tile=512):
    """x_nchw: (B, C, H, W) f32; matches PyTorch SelfTransformer.forward."""
    B, C, H, W = x_nchw.shape
    assert C % num_heads == 0, "dim must be divisible by num_heads"
    HW = H * W
    ch = C // num_heads
    Cp = _round_up(C, 8)           # channels ride the sublane axis -> pad to 8, not 128
    pad_c = Cp - C
    Thw = _pick_hw_tile(HW, hw_tile)
    T = HW // Thw
    # TODO(synk): ragged HW tiles (HW not a multiple of a 128-aligned tile) fall back to
    # a single full-HW tile instead of a masked tail.

    # channel-major, no transpose needed (only a reshape)
    x_cm = x_nchw.reshape(B, C, HW).astype(jnp.float32)
    if pad_c:
        x_cm = jnp.pad(x_cm, ((0, 0), (0, pad_c), (0, 0)))

    ln_w = params["ln_w"].reshape(C).astype(jnp.float32)
    ln_b = params["ln_b"].reshape(C).astype(jnp.float32)
    temp = params["temp"].reshape(num_heads).astype(jnp.float32)

    def conv_w(name):                                   # torch 1x1 conv weight (out, in, 1, 1)
        return params[name].reshape(C, C).astype(jnp.float32)

    wq, wk, wv, wo = (conv_w(n) for n in ("wq", "wk", "wv", "wo"))

    def fold_and_pad(w):
        wf = w * ln_w[None, :]                          # fold LN scale into input channels
        bf = w @ ln_b                                   # fold LN bias into per-out-channel bias
        wf = jnp.pad(wf, ((0, pad_c), (0, pad_c))).astype(jnp.bfloat16)
        bf = jnp.pad(bf, (0, pad_c)).reshape(Cp, 1).astype(jnp.float32)
        return wf, bf

    wq_p, bq = fold_and_pad(wq)
    wk_p, bk = fold_and_pad(wk)
    wv_p, bv = fold_and_pad(wv)
    wo_p = jnp.pad(wo, ((0, pad_c), (0, pad_c))).astype(jnp.bfloat16)

    # block-diagonal head structure: scale = temperature inside a head block, 0 outside;
    # nbias = -1e30 outside the block (padded channels form their own inert group).
    cidx = jnp.arange(Cp)
    hid = jnp.where(cidx < C, cidx // ch, num_heads)
    same = hid[:, None] == hid[None, :]
    temp_pc = jnp.where(cidx < C, temp[jnp.clip(cidx // ch, 0, num_heads - 1)], 1.0)
    scale_m = jnp.where(same, temp_pc[:, None], 0.0).astype(jnp.float32)
    nbias_m = jnp.where(same, 0.0, -1e30).astype(jnp.float32)

    kernel = functools.partial(_self_transformer_kernel, inv_c=1.0 / C)

    out_cm = pl.pallas_call(
        kernel,
        out_shape=jax.ShapeDtypeStruct((B, Cp, HW), jnp.float32),
        grid=(B, 2, T),
        in_specs=[
            pl.BlockSpec((1, Cp, Thw), lambda b, p, t: (b, 0, t)),   # x (read in both phases)
            pl.BlockSpec((Cp, Cp), lambda b, p, t: (0, 0)),          # wq
            pl.BlockSpec((Cp, Cp), lambda b, p, t: (0, 0)),          # wk
            pl.BlockSpec((Cp, Cp), lambda b, p, t: (0, 0)),          # wv
            pl.BlockSpec((Cp, Cp), lambda b, p, t: (0, 0)),          # wo
            pl.BlockSpec((Cp, 1), lambda b, p, t: (0, 0)),           # bq
            pl.BlockSpec((Cp, 1), lambda b, p, t: (0, 0)),           # bk
            pl.BlockSpec((Cp, 1), lambda b, p, t: (0, 0)),           # bv
            pl.BlockSpec((Cp, Cp), lambda b, p, t: (0, 0)),          # scale_m
            pl.BlockSpec((Cp, Cp), lambda b, p, t: (0, 0)),          # nbias_m
        ],
        # Phase 0 parks the output on tile 0 (never written back until phase 1
        # overwrites it); phase 1 walks the tiles and produces the real output.
        out_specs=pl.BlockSpec((1, Cp, Thw), lambda b, p, t: (b, 0, t * p)),
        scratch_shapes=[
            pltpu.VMEM((Cp, Cp), jnp.float32),   # Gram accumulator
            pltpu.VMEM((Cp, 1), jnp.float32),    # sum_hw q^2 (column)
            pltpu.VMEM((1, Cp), jnp.float32),    # sum_hw k^2 (row)
            pltpu.VMEM((Cp, Cp), jnp.float32),   # block-diagonal softmax attention
        ],
        compiler_params=pltpu.CompilerParams(
            dimension_semantics=("parallel", "arbitrary", "arbitrary"),
        ),
    )(x_cm, wq_p, wk_p, wv_p, wo_p, bq, bk, bv, scale_m, nbias_m)

    return out_cm[:, :C, :].reshape(B, C, H, W)


def reference(x, params, num_heads):
    """Pure-JAX f32 reference mirroring the PyTorch forward exactly."""
    B, C, H, W = x.shape
    HW = H * W
    xt = jnp.transpose(x.reshape(B, C, HW), (0, 2, 1))           # b (hw) c
    mu = xt.mean(-1, keepdims=True)
    var = ((xt - mu) ** 2).mean(-1, keepdims=True)
    y = (xt - mu) / jnp.sqrt(var + 1e-5) * params["ln_w"] + params["ln_b"]
    y4 = jnp.transpose(y, (0, 2, 1)).reshape(B, C, H, W)

    def conv1x1(z, w):
        return jnp.einsum("bchw,oc->bohw", z, w[:, :, 0, 0])

    q = conv1x1(y4, params["wq"])
    k = conv1x1(y4, params["wk"])
    v = conv1x1(y4, params["wv"])
    ch = C // num_heads
    qh = q.reshape(B, num_heads, ch, HW)
    kh = k.reshape(B, num_heads, ch, HW)
    vh = v.reshape(B, num_heads, ch, HW)
    qn = qh / jnp.maximum(jnp.sqrt(jnp.sum(qh * qh, -1, keepdims=True)), 1e-12)
    kn = kh / jnp.maximum(jnp.sqrt(jnp.sum(kh * kh, -1, keepdims=True)), 1e-12)
    attn = jnp.einsum("bhcs,bhds->bhcd", qn, kn) * params["temp"].reshape(1, num_heads, 1, 1)
    attn = jax.nn.softmax(attn, axis=-1)
    o = jnp.einsum("bhcd,bhds->bhcs", attn, vh).reshape(B, C, H, W)
    o = conv1x1(o, params["wo"])
    return x + o


if __name__ == "__main__":
    def run_case(B, C, H, W, num_heads, hw_tile, seed):
        key = jax.random.PRNGKey(seed)
        kx, kq, kk_, kv, ko, kw, kb, kt = jax.random.split(key, 8)
        x = jax.random.normal(kx, (B, C, H, W), dtype=jnp.float32)
        params = {
            "ln_w": 1.0 + 0.1 * jax.random.normal(kw, (C,), dtype=jnp.float32),
            "ln_b": 0.1 * jax.random.normal(kb, (C,), dtype=jnp.float32),
            "wq": 0.1 * jax.random.normal(kq, (C, C, 1, 1), dtype=jnp.float32),
            "wk": 0.1 * jax.random.normal(kk_, (C, C, 1, 1), dtype=jnp.float32),
            "wv": 0.1 * jax.random.normal(kv, (C, C, 1, 1), dtype=jnp.float32),
            "wo": 0.1 * jax.random.normal(ko, (C, C, 1, 1), dtype=jnp.float32),
            "temp": 0.5 + jax.random.uniform(kt, (num_heads, 1, 1), dtype=jnp.float32),
        }
        out = jax.block_until_ready(self_transformer(x, params, num_heads, hw_tile=hw_tile))
        ref = reference(x, params, num_heads)
        err = float(jnp.max(jnp.abs(out - ref)))
        assert out.shape == x.shape
        # bf16 projections + approx reciprocals -> a slightly looser tolerance than pure f32.
        assert jnp.allclose(out, ref, atol=3e-2, rtol=3e-2), f"max abs err {err}"
        return err

    # Restormer-like dim, two HW tiles: exercises the two-pass accumulate/apply pipeline.
    run_case(B=2, C=48, H=16, W=16, num_heads=6, hw_tile=128, seed=0)
    # Tiny channel count: exercises channel padding + the inert padded head group.
    run_case(B=1, C=4, H=8, W=8, num_heads=2, hw_tile=512, seed=1)

    print("KERNEL_OK")
</pallas_src>

<mosaic_0001>
module attributes {stable_mosaic.version = 11 : i64} {
  func.func @_self_transformer_kernel(%arg0: i32, %arg1: i32, %arg2: i32, %arg3: memref<1x48x128xf32, #tpu.memory_space<vmem>>, %arg4: memref<48x48xbf16, #tpu.memory_space<vmem>>, %arg5: memref<48x48xbf16, #tpu.memory_space<vmem>>, %arg6: memref<48x48xbf16, #tpu.memory_space<vmem>>, %arg7: memref<48x48xbf16, #tpu.memory_space<vmem>>, %arg8: memref<48x1xf32, #tpu.memory_space<vmem>>, %arg9: memref<48x1xf32, #tpu.memory_space<vmem>>, %arg10: memref<48x1xf32, #tpu.memory_space<vmem>>, %arg11: memref<48x48xf32, #tpu.memory_space<vmem>>, %arg12: memref<48x48xf32, #tpu.memory_space<vmem>>, %arg13: memref<1x48x128xf32, #tpu.memory_space<vmem>>, %arg14: memref<48x48xf32, #tpu.memory_space<vmem>>, %arg15: memref<48x1xf32, #tpu.memory_space<vmem>>, %arg16: memref<1x48xf32, #tpu.memory_space<vmem>>, %arg17: memref<48x48xf32, #tpu.memory_space<vmem>>) attributes {dimension_semantics = [#tpu.dimension_semantics<parallel>, #tpu.dimension_semantics<arbitrary>, #tpu.dimension_semantics<arbitrary>], iteration_bounds = array<i64: 2, 2, 2>, scalar_prefetch = 0 : i64, scratch_operands = 4 : i64, tpu.core_type = #tpu.core_type<tc>, window_params = [{transform_indices = @transform_0, window_bounds = array<i64: 1, 48, 128>}, {pipeline_mode = #tpu.pipeline_mode<synchronous>, transform_indices = @transform_1, window_bounds = array<i64: 48, 48>}, {pipeline_mode = #tpu.pipeline_mode<synchronous>, transform_indices = @transform_2, window_bounds = array<i64: 48, 48>}, {pipeline_mode = #tpu.pipeline_mode<synchronous>, transform_indices = @transform_3, window_bounds = array<i64: 48, 48>}, {pipeline_mode = #tpu.pipeline_mode<synchronous>, transform_indices = @transform_4, window_bounds = array<i64: 48, 48>}, {pipeline_mode = #tpu.pipeline_mode<synchronous>, transform_indices = @transform_5, window_bounds = array<i64: 48, 1>}, {pipeline_mode = #tpu.pipeline_mode<synchronous>, transform_indices = @transform_6, window_bounds = array<i64: 48, 1>}, {pipeline_mode = #tpu.pipeline_mode<synchronous>, transform_indices = @transform_7, window_bounds = array<i64: 48, 1>}, {pipeline_mode = #tpu.pipeline_mode<synchronous>, transform_indices = @transform_8, window_bounds = array<i64: 48, 48>}, {pipeline_mode = #tpu.pipeline_mode<synchronous>, transform_indices = @transform_9, window_bounds = array<i64: 48, 48>}, {transform_indices = @transform_10, window_bounds = array<i64: 1, 48, 128>}]} {
    %c0 = arith.constant 0 : index
    %c0_0 = arith.constant 0 : index
    %c0_1 = arith.constant 0 : index
    %0 = vector.load %arg3[%c0, %c0_0, %c0_1] : memref<1x48x128xf32, #tpu.memory_space<vmem>>, vector<1x48x128xf32>
    %1 = vector.shape_cast %0 : vector<1x48x128xf32> to vector<48x128xf32>
    %cst = arith.constant dense<0.000000e+00> : vector<128xf32>
    %2 = vector.multi_reduction <add>, %1, %cst [0] : vector<48x128xf32> to vector<128xf32>
    %3 = vector.shape_cast %2 : vector<128xf32> to vector<1x128xf32>
    %4 = arith.mulf %1, %1 : vector<48x128xf32>
    %cst_2 = arith.constant dense<0.000000e+00> : vector<128xf32>
    %5 = vector.multi_reduction <add>, %4, %cst_2 [0] : vector<48x128xf32> to vector<128xf32>
    %6 = vector.shape_cast %5 : vector<128xf32> to vector<1x128xf32>
    %cst_3 = arith.constant 0.020833334 : f32
    %7 = vector.broadcast %cst_3 : f32 to vector<1x128xf32>
    %8 = arith.mulf %3, %7 : vector<1x128xf32>
    %cst_4 = arith.constant 0.020833334 : f32
    %9 = vector.broadcast %cst_4 : f32 to vector<1x128xf32>
    %10 = arith.mulf %6, %9 : vector<1x128xf32>
    %11 = arith.mulf %8, %8 : vector<1x128xf32>
    %12 = arith.subf %10, %11 : vector<1x128xf32>
    %13 = vector.broadcast %8 : vector<1x128xf32> to vector<48x128xf32>
    %14 = arith.subf %1, %13 : vector<48x128xf32>
    %cst_5 = arith.constant 9.99999974E-6 : f32
    %15 = vector.broadcast %cst_5 : f32 to vector<1x128xf32>
    %16 = arith.addf %12, %15 : vector<1x128xf32>
    %17 = math.rsqrt %16 : vector<1x128xf32>
    %18 = vector.broadcast %17 : vector<1x128xf32> to vector<48x128xf32>
    %19 = arith.mulf %14, %18 : vector<48x128xf32>
    %20 = arith.truncf %19 : vector<48x128xf32> to vector<48x128xbf16>
    %c0_i32 = arith.constant 0 : i32
    %21 = arith.cmpi eq, %arg1, %c0_i32 : i32
    %22 = arith.extui %21 : i1 to i32
    %c0_i32_6 = arith.constant 0 : i32
    %23 = arith.cmpi ne, %22, %c0_i32_6 : i32
    scf.if %23 {
      %c0_i32_8 = arith.constant 0 : i32
      %27 = arith.cmpi eq, %arg2, %c0_i32_8 : i32
      %28 = arith.extui %27 : i1 to i32
      %c0_i32_9 = arith.constant 0 : i32
      %29 = arith.cmpi ne, %28, %c0_i32_9 : i32
      scf.if %29 {
        %cst_39 = arith.constant 0.000000e+00 : f32
        %59 = vector.broadcast %cst_39 : f32 to vector<48x48xf32>
        %c0_40 = arith.constant 0 : index
        %c0_41 = arith.constant 0 : index
        %60 = vector.load %arg14[%c0_40, %c0_41] : memref<48x48xf32, #tpu.memory_space<vmem>>, vector<48x48xf32>
        tpu.vector_store %arg14[%c0_40, %c0_41], %59 {strides = array<i32>} : memref<48x48xf32, #tpu.memory_space<vmem>>, vector<48x48xf32>,
        %cst_42 = arith.constant 0.000000e+00 : f32
        %61 = vector.broadcast %cst_42 : f32 to vector<48x1xf32>
        %c0_43 = arith.constant 0 : index
        %c0_44 = arith.constant 0 : index
        %62 = vector.load %arg15[%c0_43, %c0_44] : memref<48x1xf32, #tpu.memory_space<vmem>>, vector<48x1xf32>
        tpu.vector_store %arg15[%c0_43, %c0_44], %61 {strides = array<i32>} : memref<48x1xf32, #tpu.memory_space<vmem>>, vector<48x1xf32>,
        %cst_45 = arith.constant 0.000000e+00 : f32
        %63 = vector.broadcast %cst_45 : f32 to vector<1x48xf32>
        %c0_46 = arith.constant 0 : index
        %c0_47 = arith.constant 0 : index
        %64 = vector.load %arg16[%c0_46, %c0_47] : memref<1x48xf32, #tpu.memory_space<vmem>>, vector<1x48xf32>
        tpu.vector_store %arg16[%c0_46, %c0_47], %63 {strides = array<i32>} : memref<1x48xf32, #tpu.memory_space<vmem>>, vector<1x48xf32>,
      } else {
      }
      %c0_10 = arith.constant 0 : index
      %c0_11 = arith.constant 0 : index
      %30 = vector.load %arg4[%c0_10, %c0_11] : memref<48x48xbf16, #tpu.memory_space<vmem>>, vector<48x48xbf16>
      %cst_12 = arith.constant dense<0.000000e+00> : vector<48x128xf32>
      %31 = tpu.matmul %30, %20, %cst_12 {dimension_numbers = #tpu.dot_dimension_numbers<[1], [0], [0], [1], [0, 0, 1, 1], [], []>} : vector<48x48xbf16>, vector<48x128xbf16>, vector<48x128xf32> -> vector<48x128xf32>
      %c0_13 = arith.constant 0 : index
      %c0_14 = arith.constant 0 : index
      %32 = vector.load %arg8[%c0_13, %c0_14] : memref<48x1xf32, #tpu.memory_space<vmem>>, vector<48x1xf32>
      %33 = vector.broadcast %32 : vector<48x1xf32> to vector<48x128xf32>
      %34 = arith.addf %31, %33 : vector<48x128xf32>
      %c0_15 = arith.constant 0 : index
      %c0_16 = arith.constant 0 : index
      %35 = vector.load %arg5[%c0_15, %c0_16] : memref<48x48xbf16, #tpu.memory_space<vmem>>, vector<48x48xbf16>
      %cst_17 = arith.constant dense<0.000000e+00> : vector<48x128xf32>
      %36 = tpu.matmul %35, %20, %cst_17 {dimension_numbers = #tpu.dot_dimension_numbers<[1], [0], [0], [1], [0, 0, 1, 1], [], []>} : vector<48x48xbf16>, vector<48x128xbf16>, vector<48x128xf32> -> vector<48x128xf32>
      %c0_18 = arith.constant 0 : index
      %c0_19 = arith.constant 0 : index
      %37 = vector.load %arg9[%c0_18, %c0_19] : memref<48x1xf32, #tpu.memory_space<vmem>>, vector<48x1xf32>
      %38 = vector.broadcast %37 : vector<48x1xf32> to vector<48x128xf32>
      %39 = arith.addf %36, %38 : vector<48x128xf32>
      %c0_20 = arith.constant 0 : index
      %c0_21 = arith.constant 0 : index
      %40 = vector.load %arg15[%c0_20, %c0_21] : memref<48x1xf32, #tpu.memory_space<vmem>>, vector<48x1xf32>
      %41 = arith.mulf %34, %34 : vector<48x128xf32>
      %cst_22 = arith.constant dense<0.000000e+00> : vector<48xf32>
      %42 = vector.multi_reduction <add>, %41, %cst_22 [1] : vector<48x128xf32> to vector<48xf32>
      %43 = vector.shape_cast %42 : vector<48xf32> to vector<48x1xf32>
      %44 = arith.addf %40, %43 : vector<48x1xf32>
      %c0_23 = arith.constant 0 : index
      %c0_24 = arith.constant 0 : index
      %45 = vector.load %arg15[%c0_23, %c0_24] : memref<48x1xf32, #tpu.memory_space<vmem>>, vector<48x1xf32>
      tpu.vector_store %arg15[%c0_23, %c0_24], %44 {strides = array<i32>} : memref<48x1xf32, #tpu.memory_space<vmem>>, vector<48x1xf32>,
      %46 = arith.mulf %39, %39 : vector<48x128xf32>
      %c0_25 = arith.constant 0 : index
      %c0_26 = arith.constant 0 : index
      %47 = vector.load %arg16[%c0_25, %c0_26] : memref<1x48xf32, #tpu.memory_space<vmem>>, vector<1x48xf32>
      %cst_27 = arith.constant 1.000000e+00 : f32
      %48 = vector.broadcast %cst_27 : f32 to vector<1x128xf32>
      %cst_28 = arith.constant dense<0.000000e+00> : vector<1x48xf32>
      %49 = tpu.matmul %48, %46, %cst_28 {dimension_numbers = #tpu.dot_dimension_numbers<[1], [1], [0], [0], [0, 0, 1, 0], [], []>} : vector<1x128xf32>, vector<48x128xf32>, vector<1x48xf32> -> vector<1x48xf32>
      %50 = arith.addf %47, %49 : vector<1x48xf32>
      %c0_29 = arith.constant 0 : index
      %c0_30 = arith.constant 0 : index
      %51 = vector.load %arg16[%c0_29, %c0_30] : memref<1x48xf32, #tpu.memory_space<vmem>>, vector<1x48xf32>
      tpu.vector_store %arg16[%c0_29, %c0_30], %50 {strides = array<i32>} : memref<1x48xf32, #tpu.memory_space<vmem>>, vector<1x48xf32>,
      %c0_31 = arith.constant 0 : index
      %c0_32 = arith.constant 0 : index
      %52 = vector.load %arg14[%c0_31, %c0_32] : memref<48x48xf32, #tpu.memory_space<vmem>>, vector<48x48xf32>
      %cst_33 = arith.constant dense<0.000000e+00> : vector<48x48xf32>
      %53 = tpu.matmul %34, %39, %cst_33 {dimension_numbers = #tpu.dot_dimension_numbers<[1], [1], [0], [0], [0, 0, 1, 0], [], []>} : vector<48x128xf32>, vector<48x128xf32>, vector<48x48xf32> -> vector<48x48xf32>
      %54 = arith.addf %52, %53 : vector<48x48xf32>
      %c0_34 = arith.constant 0 : index
      %c0_35 = arith.constant 0 : index
      %55 = vector.load %arg14[%c0_34, %c0_35] : memref<48x48xf32, #tpu.memory_space<vmem>>, vector<48x48xf32>
      tpu.vector_store %arg14[%c0_34, %c0_35], %54 {strides = array<i32>} : memref<48x48xf32, #tpu.memory_space<vmem>>, vector<48x48xf32>,
      %c0_36 = arith.constant 0 : index
      %c0_37 = arith.constant 0 : index
      %c0_38 = arith.constant 0 : index
      %56 = vector.load %arg13[%c0_36, %c0_37, %c0_38] : memref<1x48x128xf32, #tpu.memory_space<vmem>>, vector<1x48x128xf32>
      %57 = vector.shape_cast %56 : vector<1x48x128xf32> to vector<48x128xf32>
      %58 = vector.shape_cast %1 : vector<48x128xf32> to vector<1x48x128xf32>
      tpu.vector_store %arg13[%c0_36, %c0_37, %c0_38], %58 {strides = array<i32>} : memref<1x48x128xf32, #tpu.memory_space<vmem>>, vector<1x48x128xf32>,
    } else {
    }
    %c1_i32 = arith.constant 1 : i32
    %24 = arith.cmpi eq, %arg1, %c1_i32 : i32
    %25 = arith.extui %24 : i1 to i32
    %c0_i32_7 = arith.constant 0 : i32
    %26 = arith.cmpi ne, %25, %c0_i32_7 : i32
    scf.if %26 {
      %c0_i32_8 = arith.constant 0 : i32
      %27 = arith.cmpi eq, %arg2, %c0_i32_8 : i32
      %28 = arith.extui %27 : i1 to i32
      %c0_i32_9 = arith.constant 0 : i32
      %29 = arith.cmpi ne, %28, %c0_i32_9 : i32
      scf.if %29 {
        %c0_24 = arith.constant 0 : index
        %c0_25 = arith.constant 0 : index
        %46 = vector.load %arg15[%c0_24, %c0_25] : memref<48x1xf32, #tpu.memory_space<vmem>>, vector<48x1xf32>
        %47 = math.sqrt %46 : vector<48x1xf32>
        %cst_26 = arith.constant 9.99999996E-13 : f32
        %48 = vector.broadcast %cst_26 : f32 to vector<48x1xf32>
        %49 = arith.maximumf %47, %48 : vector<48x1xf32>
        %50 = tpu.reciprocal %49 {approx = true} : vector<48x1xf32> -> vector<48x1xf32>
        %c0_27 = arith.constant 0 : index
        %c0_28 = arith.constant 0 : index
        %51 = vector.load %arg16[%c0_27, %c0_28] : memref<1x48xf32, #tpu.memory_space<vmem>>, vector<1x48xf32>
        %52 = math.sqrt %51 : vector<1x48xf32>
        %cst_29 = arith.constant 9.99999996E-13 : f32
        %53 = vector.broadcast %cst_29 : f32 to vector<1x48xf32>
        %54 = arith.maximumf %52, %53 : vector<1x48xf32>
        %55 = tpu.reciprocal %54 {approx = true} : vector<1x48xf32> -> vector<1x48xf32>
        %c0_30 = arith.constant 0 : index
        %c0_31 = arith.constant 0 : index
        %56 = vector.load %arg14[%c0_30, %c0_31] : memref<48x48xf32, #tpu.memory_space<vmem>>, vector<48x48xf32>
        %57 = vector.broadcast %50 : vector<48x1xf32> to vector<48x48xf32>
        %58 = arith.mulf %56, %57 : vector<48x48xf32>
        %59 = vector.broadcast %55 : vector<1x48xf32> to vector<48x48xf32>
        %60 = arith.mulf %58, %59 : vector<48x48xf32>
        %c0_32 = arith.constant 0 : index
        %c0_33 = arith.constant 0 : index
        %61 = vector.load %arg11[%c0_32, %c0_33] : memref<48x48xf32, #tpu.memory_space<vmem>>, vector<48x48xf32>
        %62 = arith.mulf %60, %61 : vector<48x48xf32>
        %c0_34 = arith.constant 0 : index
        %c0_35 = arith.constant 0 : index
        %63 = vector.load %arg12[%c0_34, %c0_35] : memref<48x48xf32, #tpu.memory_space<vmem>>, vector<48x48xf32>
        %64 = arith.addf %62, %63 : vector<48x48xf32>
        %cst_36 = arith.constant dense<0xFF800000> : vector<48xf32>
        %65 = vector.multi_reduction <maximumf>, %64, %cst_36 [1] : vector<48x48xf32> to vector<48xf32>
        %66 = vector.shape_cast %65 : vector<48xf32> to vector<48x1xf32>
        %67 = vector.broadcast %66 : vector<48x1xf32> to vector<48x48xf32>
        %68 = arith.subf %64, %67 : vector<48x48xf32>
        %69 = math.exp %68 : vector<48x48xf32>
        %cst_37 = arith.constant dense<0.000000e+00> : vector<48xf32>
        %70 = vector.multi_reduction <add>, %69, %cst_37 [1] : vector<48x48xf32> to vector<48xf32>
        %71 = vector.shape_cast %70 : vector<48xf32> to vector<48x1xf32>
        %72 = tpu.reciprocal %71 {approx = true} : vector<48x1xf32> -> vector<48x1xf32>
        %73 = vector.broadcast %72 : vector<48x1xf32> to vector<48x48xf32>
        %74 = arith.mulf %69, %73 : vector<48x48xf32>
        %c0_38 = arith.constant 0 : index
        %c0_39 = arith.constant 0 : index
        %75 = vector.load %arg17[%c0_38, %c0_39] : memref<48x48xf32, #tpu.memory_space<vmem>>, vector<48x48xf32>
        tpu.vector_store %arg17[%c0_38, %c0_39], %74 {strides = array<i32>} : memref<48x48xf32, #tpu.memory_space<vmem>>, vector<48x48xf32>,
      } else {
      }
      %c0_10 = arith.constant 0 : index
      %c0_11 = arith.constant 0 : index
      %30 = vector.load %arg6[%c0_10, %c0_11] : memref<48x48xbf16, #tpu.memory_space<vmem>>, vector<48x48xbf16>
      %cst_12 = arith.constant dense<0.000000e+00> : vector<48x128xf32>
      %31 = tpu.matmul %30, %20, %cst_12 {dimension_numbers = #tpu.dot_dimension_numbers<[1], [0], [0], [1], [0, 0, 1, 1], [], []>} : vector<48x48xbf16>, vector<48x128xbf16>, vector<48x128xf32> -> vector<48x128xf32>
      %c0_13 = arith.constant 0 : index
      %c0_14 = arith.constant 0 : index
      %32 = vector.load %arg10[%c0_13, %c0_14] : memref<48x1xf32, #tpu.memory_space<vmem>>, vector<48x1xf32>
      %33 = vector.broadcast %32 : vector<48x1xf32> to vector<48x128xf32>
      %34 = arith.addf %31, %33 : vector<48x128xf32>
      %c0_15 = arith.constant 0 : index
      %c0_16 = arith.constant 0 : index
      %35 = vector.load %arg17[%c0_15, %c0_16] : memref<48x48xf32, #tpu.memory_space<vmem>>, vector<48x48xf32>
      %36 = arith.truncf %35 : vector<48x48xf32> to vector<48x48xbf16>
      %37 = arith.truncf %34 : vector<48x128xf32> to vector<48x128xbf16>
      %cst_17 = arith.constant dense<0.000000e+00> : vector<48x128xf32>
      %38 = tpu.matmul %36, %37, %cst_17 {dimension_numbers = #tpu.dot_dimension_numbers<[1], [0], [0], [1], [0, 0, 1, 1], [], []>} : vector<48x48xbf16>, vector<48x128xbf16>, vector<48x128xf32> -> vector<48x128xf32>
      %c0_18 = arith.constant 0 : index
      %c0_19 = arith.constant 0 : index
      %39 = vector.load %arg7[%c0_18, %c0_19] : memref<48x48xbf16, #tpu.memory_space<vmem>>, vector<48x48xbf16>
      %40 = arith.truncf %38 : vector<48x128xf32> to vector<48x128xbf16>
      %cst_20 = arith.constant dense<0.000000e+00> : vector<48x128xf32>
      %41 = tpu.matmul %39, %40, %cst_20 {dimension_numbers = #tpu.dot_dimension_numbers<[1], [0], [0], [1], [0, 0, 1, 1], [], []>} : vector<48x48xbf16>, vector<48x128xbf16>, vector<48x128xf32> -> vector<48x128xf32>
      %42 = arith.addf %1, %41 : vector<48x128xf32>
      %c0_21 = arith.constant 0 : index
      %c0_22 = arith.constant 0 : index
      %c0_23 = arith.constant 0 : index
      %43 = vector.load %arg13[%c0_21, %c0_22, %c0_23] : memref<1x48x128xf32, #tpu.memory_space<vmem>>, vector<1x48x128xf32>
      %44 = vector.shape_cast %43 : vector<1x48x128xf32> to vector<48x128xf32>
      %45 = vector.shape_cast %42 : vector<48x128xf32> to vector<1x48x128xf32>
      tpu.vector_store %arg13[%c0_21, %c0_22, %c0_23], %45 {strides = array<i32>} : memref<1x48x128xf32, #tpu.memory_space<vmem>>, vector<1x48x128xf32>,
    } else {
    }
    return
  }
  func.func @transform_0(%arg0: i32, %arg1: i32, %arg2: i32) -> (i32, i32, i32) {
    %c0_i32 = arith.constant 0 : i32
    %c0_i32_0 = arith.constant 0 : i32
    return %arg0, %c0_i32, %arg2 : i32, i32, i32
  }
  func.func @transform_1(%arg0: i32, %arg1: i32, %arg2: i32) -> (i32, i32) {
    %c0_i32 = arith.constant 0 : i32
    %c0_i32_0 = arith.constant 0 : i32
    %c0_i32_1 = arith.constant 0 : i32
    return %c0_i32, %c0_i32_0 : i32, i32
  }
  func.func @transform_2(%arg0: i32, %arg1: i32, %arg2: i32) -> (i32, i32) {
    %c0_i32 = arith.constant 0 : i32
    %c0_i32_0 = arith.constant 0 : i32
    %c0_i32_1 = arith.constant 0 : i32
    return %c0_i32, %c0_i32_0 : i32, i32
  }
  func.func @transform_3(%arg0: i32, %arg1: i32, %arg2: i32) -> (i32, i32) {
    %c0_i32 = arith.constant 0 : i32
    %c0_i32_0 = arith.constant 0 : i32
    %c0_i32_1 = arith.constant 0 : i32
    return %c0_i32, %c0_i32_0 : i32, i32
  }
  func.func @transform_4(%arg0: i32, %arg1: i32, %arg2: i32) -> (i32, i32) {
    %c0_i32 = arith.constant 0 : i32
    %c0_i32_0 = arith.constant 0 : i32
    %c0_i32_1 = arith.constant 0 : i32
    return %c0_i32, %c0_i32_0 : i32, i32
  }
  func.func @transform_5(%arg0: i32, %arg1: i32, %arg2: i32) -> (i32, i32) {
    %c0_i32 = arith.constant 0 : i32
    %c0_i32_0 = arith.constant 0 : i32
    %c0_i32_1 = arith.constant 0 : i32
    return %c0_i32, %c0_i32_0 : i32, i32
  }
  func.func @transform_6(%arg0: i32, %arg1: i32, %arg2: i32) -> (i32, i32) {
    %c0_i32 = arith.constant 0 : i32
    %c0_i32_0 = arith.constant 0 : i32
    %c0_i32_1 = arith.constant 0 : i32
    return %c0_i32, %c0_i32_0 : i32, i32
  }
  func.func @transform_7(%arg0: i32, %arg1: i32, %arg2: i32) -> (i32, i32) {
    %c0_i32 = arith.constant 0 : i32
    %c0_i32_0 = arith.constant 0 : i32
    %c0_i32_1 = arith.constant 0 : i32
    return %c0_i32, %c0_i32_0 : i32, i32
  }
  func.func @transform_8(%arg0: i32, %arg1: i32, %arg2: i32) -> (i32, i32) {
    %c0_i32 = arith.constant 0 : i32
    %c0_i32_0 = arith.constant 0 : i32
    %c0_i32_1 = arith.constant 0 : i32
    return %c0_i32, %c0_i32_0 : i32, i32
  }
  func.func @transform_9(%arg0: i32, %arg1: i32, %arg2: i32) -> (i32, i32) {
    %c0_i32 = arith.constant 0 : i32
    %c0_i32_0 = arith.constant 0 : i32
    %c0_i32_1 = arith.constant 0 : i32
    return %c0_i32, %c0_i32_0 : i32, i32
  }
  func.func @transform_10(%arg0: i32, %arg1: i32, %arg2: i32) -> (i32, i32, i32) {
    %0 = arith.muli %arg2, %arg1 : i32
    %c0_i32 = arith.constant 0 : i32
    %c0_i32_0 = arith.constant 0 : i32
    return %arg0, %c0_i32, %0 : i32, i32, i32
  }
}

</mosaic_0001>

<llo_original>
// kernel: tpu_custom_call.1
$region0: #{tpu_custom_call.1}
  #allocation0 [shape = 'u32[]', space=smem, size = 0x4, offset = 0x4, fixed_abs, tag = 'smem constant byte address 0x4 - core index']
  #allocation1 [shape = 'u32[144,128]{1,0:T(1,128)}', space=vmem, size = 0x12000, scoped, tag = 'internal scratch']
  #allocation2 [shape = 'f32[48,48]{1,0:T(8,128)}', space=vmem, size = 0x6000, scoped, tag = 'scratch operand']
  #allocation3 [shape = 'f32[48,1]{1,0:T(8,128)}', space=vmem, size = 0x6000, scoped, tag = 'scratch operand']
  #allocation4 [shape = 'f32[1,48]{1,0:T(1,128)}', space=vmem, size = 0x200, scoped, tag = 'scratch operand']
  #allocation5 [shape = 'f32[48,48]{1,0:T(8,128)}', space=vmem, size = 0x6000, scoped, tag = 'scratch operand']
  %s0 = inlined_call_operand.hbm [shape: f32[2,48,256], index: 0, kind: input, shape index: {}]
  %s1 = inlined_call_operand.vmem [shape: bf16[48,48], index: 1, kind: input, shape index: {}]
  %s2 = inlined_call_operand.vmem [shape: bf16[48,48], index: 2, kind: input, shape index: {}]
  %s3 = inlined_call_operand.hbm [shape: bf16[48,48], index: 3, kind: input, shape index: {}]
  %s4 = inlined_call_operand.hbm [shape: bf16[48,48], index: 4, kind: input, shape index: {}]
  %s5 = inlined_call_operand.vmem [shape: f32[48,1], index: 5, kind: input, shape index: {}]
  %s6 = inlined_call_operand.vmem [shape: f32[48,1], index: 6, kind: input, shape index: {}]
  %s7 = inlined_call_operand.vmem [shape: f32[48,1], index: 7, kind: input, shape index: {}]
  %s8 = inlined_call_operand.vmem [shape: f32[48,48], index: 8, kind: input, shape index: {}]
  %s9 = inlined_call_operand.vmem [shape: f32[48,48], index: 9, kind: input, shape index: {}]
  %s10 = inlined_call_operand.hbm [shape: f32[2,48,256], index: 10, kind: output, shape index: {}]
  %s11 = sld [smem:[#allocation0]]
  $region101: #{tpu_custom_call.1} parent=0
    _
  %s13 = ssub.s32 1, %s11
  %s14 = scalar_select 0, %s13, %s11
  $region1: #{tpu_custom_call.1} parent=0
    #allocation6 [shape = 'u8[49152]{0}', space=vmem, size = 0xc000, scoped, tag = 'input window, operand 0']
    #allocation7 [shape = 's32[2]{0}', space=sflag, size = 0x8, scoped, tag = 'scoped memory for tpu_custom_call.1']
    #allocation8 [shape = 's32[2]{0}', space=sflag, size = 0x8, scoped, tag = 'scoped memory for tpu_custom_call.1']
    #allocation9 [shape = 'u8[12288]{0}', space=vmem, size = 0x3000, scoped, tag = 'input window, operand 3, single buffered']
    #allocation10 [shape = 's32[1]{0}', space=sflag, size = 0x4, scoped, tag = 'scoped memory for tpu_custom_call.1']
    #allocation11 [shape = 'u8[12288]{0}', space=vmem, size = 0x3000, scoped, tag = 'input window, operand 4, single buffered']
    #allocation12 [shape = 'u8[49152]{0}', space=vmem, size = 0xc000, scoped, tag = 'output window, operand 0']
    %15 = vsyncpa [#allocation7], 0
    %s16 = scalar_lea.sflag [#allocation7], 1
    %17 = vsyncpa %s16, 0
    %18 = vsyncpa [#allocation10], 0
    %19 = vsyncpa [#allocation8], 0
    %s20 = scalar_lea.sflag [#allocation8], 1
    %21 = vsyncpa %s20, 0
    loop: start=0, step=1, limit=10
    $region2: #{tpu_custom_call.1} parent=1 // loop_pre_header
      _
    $region3: #{tpu_custom_call.1} parent=1 // loop_header
      %s23 = sphi 0, %s27
      %p24 = scmp.ge.s32.totalorder %s23, 10
      %s30 = sphi 0, %s49
      %s31 = sphi 0, %s45
      %s32 = sphi 0, %s41
      %s33 = sphi 0, %s30
      %s34 = sphi 0, %s31
      %s35 = sphi 0, %s32
      %s36 = sphi 0, %s33
      %s37 = sphi 0, %s34
      %s38 = sphi 0, %s35
      %s54 = sphi 0, %s56
      %s57 = sphi 0, %s54
      %s58 = sphi 0, %s57
      %s74 = sphi 0, %s58
      %s78 = sphi 0, %s78
      %s80 = sphi 0, %s78
      %s81 = sphi 0, %s80
      %s95 = sphi 0, %s81
      %s99 = sphi 0, %s99
      %s101 = sphi 0, %s99
      %s102 = sphi 0, %s101
      %s116 = sphi 0, %s102
      %s120 = sphi 0, %s120
      %s122 = sphi 0, %s120
      %s123 = sphi 0, %s122
      %s137 = sphi 0, %s123
      %s141 = sphi 0, %s141
      %s143 = sphi 0, %s141
      %s144 = sphi 0, %s143
      %s158 = sphi 0, %s144
      %s162 = sphi 0, %s162
      %s164 = sphi 0, %s162
      %s165 = sphi 0, %s164
      %s179 = sphi 0, %s165
      %s183 = sphi 0, %s183
      %s185 = sphi 0, %s183
      %s186 = sphi 0, %s185
      %s200 = sphi 0, %s186
      %s204 = sphi 0, %s204
      %s206 = sphi 0, %s204
      %s207 = sphi 0, %s206
      %s221 = sphi 0, %s207
      %s225 = sphi 0, %s225
      %s227 = sphi 0, %s225
      %s228 = sphi 0, %s227
      %s242 = sphi 0, %s228
      %s246 = sphi 0, %s246
      %s248 = sphi 0, %s246
      %s249 = sphi 0, %s248
      %s263 = sphi 0, %s249
      %s273 = sphi 0, %s275
      %s276 = sphi 0, %s273
      %s277 = sphi 0, %s276
      %s293 = sphi 0, %s277
    $region4: #{tpu_custom_call.1} parent=1 // loop_header_branch
      %26 = sbr.rel (%p24) target = $region8
    $region5: #{tpu_custom_call.1} parent=1 // loop_body
      %s28 = ssub.s32 %s23, 1
      %s29 = ssub.s32 %s23, 2
      %s39 = sadd.s32 1, %s32
      %p40 = scmp.ge.s32.totalorder %s39, 2
      %s41 = scalar_select %p40, 0, %s39
      %s42 = sadd.s32 1, %s31
      %s43 = scalar_select %p40, %s42, %s31
      %p44 = scmp.ge.s32.totalorder %s43, 2
      %s45 = scalar_select %p44, 0, %s43
      %s46 = sadd.s32 1, %s30
      %s47 = scalar_select %p44, %s46, %s30
      %p48 = scmp.ge.s32.totalorder %s47, 2
      %s49 = scalar_select %p48, 0, %s47
      %s50 = ssub.s32 %s30, %s49
      %s51 = ssub.s32 %s32, %s41
      %s52 = sor.u32 %s50, %s51
      %p53 = scmp.eq.s32.totalorder %s52, 0
      %s55 = sadd.s32 %s54, 1
      %s56 = scalar_select %p53, %s54, %s55
      %p59 = pneg %p53
      %p60 = scmp.eq.s32.totalorder %s23, 7
      %p61 = por %p59, %p60
      %p62 = scmp.ne.s32.totalorder %s54, %s57
      %p63 = scmp.eq.s32.totalorder %s23, 0
      %p64 = por %p62, %p63
      %p65 = scmp.ne.s32.totalorder %s54, %s57
      %p66 = scmp.eq.s32.totalorder %s28, 7
      %p67 = por %p65, %p66
      %p68 = scmp.ne.s32.totalorder %s57, %s58
      %p69 = scmp.eq.s32.totalorder %s28, 0
      %p70 = por %p68, %p69
      %p71 = scmp.ne.s32.totalorder %s57, %s58
      %p72 = scmp.eq.s32.totalorder %s29, 7
      %p73 = por %p71, %p72
      %p75 = scmp.ne.s32.totalorder %s58, %s74
      %p76 = scmp.eq.s32.totalorder %s29, 0
      %p77 = por %p75, %p76
      %s79 = sadd.s32 %s78, 1
      %p82 = scmp.eq.s32.totalorder %s23, 7
      %p83 = scmp.ne.s32.totalorder %s78, %s80
      %p84 = scmp.eq.s32.totalorder %s23, 0
      %p85 = por %p83, %p84
      %p86 = scmp.ne.s32.totalorder %s78, %s80
      %p87 = scmp.eq.s32.totalorder %s28, 7
      %p88 = por %p86, %p87
      %p89 = scmp.ne.s32.totalorder %s80, %s81
      %p90 = scmp.eq.s32.totalorder %s28, 0
      %p91 = por %p89, %p90
      %p92 = scmp.ne.s32.totalorder %s80, %s81
      %p93 = scmp.eq.s32.totalorder %s29, 7
      %p94 = por %p92, %p93
      %p96 = scmp.ne.s32.totalorder %s81, %s95
      %p97 = scmp.eq.s32.totalorder %s29, 0
      %p98 = por %p96, %p97
      %s100 = sadd.s32 %s99, 1
      %p103 = scmp.eq.s32.totalorder %s23, 7
      %p104 = scmp.ne.s32.totalorder %s99, %s101
      %p105 = scmp.eq.s32.totalorder %s23, 0
      %p106 = por %p104, %p105
      %p107 = scmp.ne.s32.totalorder %s99, %s101
      %p108 = scmp.eq.s32.totalorder %s28, 7
      %p109 = por %p107, %p108
      %p110 = scmp.ne.s32.totalorder %s101, %s102
      %p111 = scmp.eq.s32.totalorder %s28, 0
      %p112 = por %p110, %p111
      %p113 = scmp.ne.s32.totalorder %s101, %s102
      %p114 = scmp.eq.s32.totalorder %s29, 7
      %p115 = por %p113, %p114
      %p117 = scmp.ne.s32.totalorder %s102, %s116
      %p118 = scmp.eq.s32.totalorder %s29, 0
      %p119 = por %p117, %p118
      %s121 = sadd.s32 %s120, 1
      %p124 = scmp.eq.s32.totalorder %s23, 7
      %p125 = scmp.ne.s32.totalorder %s120, %s122
      %p126 = scmp.eq.s32.totalorder %s23, 0
      %p127 = por %p125, %p126
      %p128 = scmp.ne.s32.totalorder %s120, %s122
      %p129 = scmp.eq.s32.totalorder %s28, 7
      %p130 = por %p128, %p129
      %p131 = scmp.ne.s32.totalorder %s122, %s123
      %p132 = scmp.eq.s32.totalorder %s28, 0
      %p133 = por %p131, %p132
      %p134 = scmp.ne.s32.totalorder %s122, %s123
      %p135 = scmp.eq.s32.totalorder %s29, 7
      %p136 = por %p134, %p135
      %p138 = scmp.ne.s32.totalorder %s123, %s137
      %p139 = scmp.eq.s32.totalorder %s29, 0
      %p140 = por %p138, %p139
      %s142 = sadd.s32 %s141, 1
      %p145 = scmp.eq.s32.totalorder %s23, 7
      %p146 = scmp.ne.s32.totalorder %s141, %s143
      %p147 = scmp.eq.s32.totalorder %s23, 0
      %p148 = por %p146, %p147
      %p149 = scmp.ne.s32.totalorder %s141, %s143
      %p150 = scmp.eq.s32.totalorder %s28, 7
      %p151 = por %p149, %p150
      %p152 = scmp.ne.s32.totalorder %s143, %s144
      %p153 = scmp.eq.s32.totalorder %s28, 0
      %p154 = por %p152, %p153
      %p155 = scmp.ne.s32.totalorder %s143, %s144
      %p156 = scmp.eq.s32.totalorder %s29, 7
      %p157 = por %p155, %p156
      %p159 = scmp.ne.s32.totalorder %s144, %s158
      %p160 = scmp.eq.s32.totalorder %s29, 0
      %p161 = por %p159, %p160
      %s163 = sadd.s32 %s162, 1
      %p166 = scmp.eq.s32.totalorder %s23, 7
      %p167 = scmp.ne.s32.totalorder %s162, %s164
      %p168 = scmp.eq.s32.totalorder %s23, 0
      %p169 = por %p167, %p168
      %p170 = scmp.ne.s32.totalorder %s162, %s164
      %p171 = scmp.eq.s32.totalorder %s28, 7
      %p172 = por %p170, %p171
      %p173 = scmp.ne.s32.totalorder %s164, %s165
      %p174 = scmp.eq.s32.totalorder %s28, 0
      %p175 = por %p173, %p174
      %p176 = scmp.ne.s32.totalorder %s164, %s165
      %p177 = scmp.eq.s32.totalorder %s29, 7
      %p178 = por %p176, %p177
      %p180 = scmp.ne.s32.totalorder %s165, %s179
      %p181 = scmp.eq.s32.totalorder %s29, 0
      %p182 = por %p180, %p181
      %s184 = sadd.s32 %s183, 1
      %p187 = scmp.eq.s32.totalorder %s23, 7
      %p188 = scmp.ne.s32.totalorder %s183, %s185
      %p189 = scmp.eq.s32.totalorder %s23, 0
      %p190 = por %p188, %p189
      %p191 = scmp.ne.s32.totalorder %s183, %s185
      %p192 = scmp.eq.s32.totalorder %s28, 7
      %p193 = por %p191, %p192
      %p194 = scmp.ne.s32.totalorder %s185, %s186
      %p195 = scmp.eq.s32.totalorder %s28, 0
      %p196 = por %p194, %p195
      %p197 = scmp.ne.s32.totalorder %s185, %s186
      %p198 = scmp.eq.s32.totalorder %s29, 7
      %p199 = por %p197, %p198
      %p201 = scmp.ne.s32.totalorder %s186, %s200
      %p202 = scmp.eq.s32.totalorder %s29, 0
      %p203 = por %p201, %p202
      %s205 = sadd.s32 %s204, 1
      %p208 = scmp.eq.s32.totalorder %s23, 7
      %p209 = scmp.ne.s32.totalorder %s204, %s206
      %p210 = scmp.eq.s32.totalorder %s23, 0
      %p211 = por %p209, %p210
      %p212 = scmp.ne.s32.totalorder %s204, %s206
      %p213 = scmp.eq.s32.totalorder %s28, 7
      %p214 = por %p212, %p213
      %p215 = scmp.ne.s32.totalorder %s206, %s207
      %p216 = scmp.eq.s32.totalorder %s28, 0
      %p217 = por %p215, %p216
      %p218 = scmp.ne.s32.totalorder %s206, %s207
      %p219 = scmp.eq.s32.totalorder %s29, 7
      %p220 = por %p218, %p219
      %p222 = scmp.ne.s32.totalorder %s207, %s221
      %p223 = scmp.eq.s32.totalorder %s29, 0
      %p224 = por %p222, %p223
      %s226 = sadd.s32 %s225, 1
      %p229 = scmp.eq.s32.totalorder %s23, 7
      %p230 = scmp.ne.s32.totalorder %s225, %s227
      %p231 = scmp.eq.s32.totalorder %s23, 0
      %p232 = por %p230, %p231
      %p233 = scmp.ne.s32.totalorder %s225, %s227
      %p234 = scmp.eq.s32.totalorder %s28, 7
      %p235 = por %p233, %p234
      %p236 = scmp.ne.s32.totalorder %s227, %s228
      %p237 = scmp.eq.s32.totalorder %s28, 0
      %p238 = por %p236, %p237
      %p239 = scmp.ne.s32.totalorder %s227, %s228
      %p240 = scmp.eq.s32.totalorder %s29, 7
      %p241 = por %p239, %p240
      %p243 = scmp.ne.s32.totalorder %s228, %s242
      %p244 = scmp.eq.s32.totalorder %s29, 0
      %p245 = por %p243, %p244
      %s247 = sadd.s32 %s246, 1
      %p250 = scmp.eq.s32.totalorder %s23, 7
      %p251 = scmp.ne.s32.totalorder %s246, %s248
      %p252 = scmp.eq.s32.totalorder %s23, 0
      %p253 = por %p251, %p252
      %p254 = scmp.ne.s32.totalorder %s246, %s248
      %p255 = scmp.eq.s32.totalorder %s28, 7
      %p256 = por %p254, %p255
      %p257 = scmp.ne.s32.totalorder %s248, %s249
      %p258 = scmp.eq.s32.totalorder %s28, 0
      %p259 = por %p257, %p258
      %p260 = scmp.ne.s32.totalorder %s248, %s249
      %p261 = scmp.eq.s32.totalorder %s29, 7
      %p262 = por %p260, %p261
      %p264 = scmp.ne.s32.totalorder %s249, %s263
      %p265 = scmp.eq.s32.totalorder %s29, 0
      %p266 = por %p264, %p265
      %s267 = smul.u32 %s32, %s31
      %s268 = smul.u32 %s41, %s45
      %s269 = ssub.s32 %s30, %s49
      %s270 = ssub.s32 %s267, %s268
      %s271 = sor.u32 %s269, %s270
      %p272 = scmp.eq.s32.totalorder %s271, 0
      %s274 = sadd.s32 %s273, 1
      %s275 = scalar_select %p272, %s273, %s274
      %p278 = pneg %p272
      %p279 = scmp.eq.s32.totalorder %s23, 7
      %p280 = por %p278, %p279
      %p281 = scmp.ne.s32.totalorder %s273, %s276
      %p282 = scmp.eq.s32.totalorder %s23, 0
      %p283 = por %p281, %p282
      %p284 = scmp.ne.s32.totalorder %s273, %s276
      %p285 = scmp.eq.s32.totalorder %s28, 7
      %p286 = por %p284, %p285
      %p287 = scmp.ne.s32.totalorder %s276, %s277
      %p288 = scmp.eq.s32.totalorder %s28, 0
      %p289 = por %p287, %p288
      %p290 = scmp.ne.s32.totalorder %s276, %s277
      %p291 = scmp.eq.s32.totalorder %s29, 7
      %p292 = por %p290, %p291
      %p294 = scmp.ne.s32.totalorder %s277, %s293
      %p295 = scmp.eq.s32.totalorder %s29, 0
      %p296 = por %p294, %p295
      %p297 = scmp.le.s32.totalorder 1, %s23
      %p298 = scmp.lt.s32.totalorder %s23, 9
      %p299 = pnand %p297, %p298
      %p300 = pneg %p299
      // Predicated region
      $region9: #{tpu_custom_call.1} parent=5 // pred_check
        _
      $region10: #{tpu_custom_call.1} parent=5 // pred_check_branch
        %302 = sbr.rel (%p299) target = $region12
      $region11: #{tpu_custom_call.1} parent=5 // pred_region
        %s303 = ssub.s32 %s23, 1
        // Predicated region
        $region13: #{tpu_custom_call.1} parent=11 // pred_check
          %p304 = pneg %p91
        $region14: #{tpu_custom_call.1} parent=11 // pred_check_branch
          %306 = sbr.rel (%p304) target = $region16
        $region15: #{tpu_custom_call.1} parent=11 // pred_region
          _
        $region16: #{tpu_custom_call.1} parent=11 // pred_fallthru
          _
        // Predicated region
        $region17: #{tpu_custom_call.1} parent=11 // pred_check
          %p307 = pneg %p112
        $region18: #{tpu_custom_call.1} parent=11 // pred_check_branch
          %309 = sbr.rel (%p307) target = $region20
        $region19: #{tpu_custom_call.1} parent=11 // pred_region
          _
        $region20: #{tpu_custom_call.1} parent=11 // pred_fallthru
          _
        // Predicated region
        $region21: #{tpu_custom_call.1} parent=11 // pred_check
          %p310 = pneg %p133
        $region22: #{tpu_custom_call.1} parent=11 // pred_check_branch
          %312 = sbr.rel (%p310) target = $region24
        $region23: #{tpu_custom_call.1} parent=11 // pred_region
          %s314 = ssub.s32 384, 384
          %315 = vsyncadd [#allocation10], %s314
          %s316 = sshll.u32 [#allocation9], 4
          %s317 = int_to_ptr.vmem [resolvable:$true] %s316
          %322 = dma.hbm_to_vmem [thread:$0]  %s3, 384, %s317, [#allocation10], 64, 64, 4
        $region24: #{tpu_custom_call.1} parent=11 // pred_fallthru
          _
        // Predicated region
        $region25: #{tpu_custom_call.1} parent=11 // pred_check
          %p323 = pneg %p154
        $region26: #{tpu_custom_call.1} parent=11 // pred_check_branch
          %325 = sbr.rel (%p323) target = $region28
        $region27: #{tpu_custom_call.1} parent=11 // pred_region
          %s327 = ssub.s32 384, 384
          %328 = vsyncadd [#allocation10], %s327
          %s329 = sshll.u32 [#allocation11], 4
          %s330 = int_to_ptr.vmem [resolvable:$true] %s329
          %335 = dma.hbm_to_vmem [thread:$0]  %s4, 384, %s330, [#allocation10], 64, 64, 4
        $region28: #{tpu_custom_call.1} parent=11 // pred_fallthru
          _
        // Predicated region
        $region29: #{tpu_custom_call.1} parent=11 // pred_check
          %p336 = pneg %p175
        $region30: #{tpu_custom_call.1} parent=11 // pred_check_branch
          %338 = sbr.rel (%p336) target = $region32
        $region31: #{tpu_custom_call.1} parent=11 // pred_region
          _
        $region32: #{tpu_custom_call.1} parent=11 // pred_fallthru
          _
        // Predicated region
        $region33: #{tpu_custom_call.1} parent=11 // pred_check
          %p339 = pneg %p196
        $region34: #{tpu_custom_call.1} parent=11 // pred_check_branch
          %341 = sbr.rel (%p339) target = $region36
        $region35: #{tpu_custom_call.1} parent=11 // pred_region
          _
        $region36: #{tpu_custom_call.1} parent=11 // pred_fallthru
          _
        // Predicated region
        $region37: #{tpu_custom_call.1} parent=11 // pred_check
          %p342 = pneg %p217
        $region38: #{tpu_custom_call.1} parent=11 // pred_check_branch
          %344 = sbr.rel (%p342) target = $region40
        $region39: #{tpu_custom_call.1} parent=11 // pred_region
          _
        $region40: #{tpu_custom_call.1} parent=11 // pred_fallthru
          _
        // Predicated region
        $region41: #{tpu_custom_call.1} parent=11 // pred_check
          %p345 = pneg %p238
        $region42: #{tpu_custom_call.1} parent=11 // pred_check_branch
          %347 = sbr.rel (%p345) target = $region44
        $region43: #{tpu_custom_call.1} parent=11 // pred_region
          _
        $region44: #{tpu_custom_call.1} parent=11 // pred_fallthru
          _
        // Predicated region
        $region45: #{tpu_custom_call.1} parent=11 // pred_check
          %p348 = pneg %p259
        $region46: #{tpu_custom_call.1} parent=11 // pred_check_branch
          %350 = sbr.rel (%p348) target = $region48
        $region47: #{tpu_custom_call.1} parent=11 // pred_region
          _
        $region48: #{tpu_custom_call.1} parent=11 // pred_fallthru
          _
      $region12: #{tpu_custom_call.1} parent=5 // pred_fallthru
        _
      %p351 = scmp.lt.s32.totalorder %s23, 8
      // Predicated region
      $region49: #{tpu_custom_call.1} parent=5 // pred_check
        %p352 = pneg %p351
      $region50: #{tpu_custom_call.1} parent=5 // pred_check_branch
        %354 = sbr.rel (%p352) target = $region52
      $region51: #{tpu_custom_call.1} parent=5 // pred_region
        // Predicated region
        $region53: #{tpu_custom_call.1} parent=51 // pred_check
          %p355 = pneg %p64
        $region54: #{tpu_custom_call.1} parent=51 // pred_check_branch
          %357 = sbr.rel (%p355) target = $region56
        $region55: #{tpu_custom_call.1} parent=51 // pred_region
          %s358 = sand.u32 %s54, 1
          %s359 = scalar_lea.sflag [#allocation7], %s358
          %s360 = sand.u32 %s54, 1
          %s361 = smul.addr %s360, 48
          %s362 = scalar_lea.vmem [#allocation6], %s361
          %s364 = ssub.s32 768, 768
          %365 = vsyncadd %s359, %s364
          %s366 = smul.addr %s30, 12
          %s367 = sadd.s32 %s32, %s366
          %s368 = smul.addr %s367, 128
          %s369 = scalar_lea.hbm %s0, %s368
          %s370 = sshll.u32 %s362, 4
          %s371 = int_to_ptr.vmem [resolvable:$true] %s370
          %376 = dma.hbm_to_vmem [thread:$0]  %s369, 768, %s371, %s359, 256, 128, 8
        $region56: #{tpu_custom_call.1} parent=51 // pred_fallthru
          _
      $region52: #{tpu_custom_call.1} parent=5 // pred_fallthru
        _
      %p377 = scmp.le.s32.totalorder 1, %s23
      %p378 = scmp.lt.s32.totalorder %s23, 9
      %p379 = pnand %p377, %p378
      %p380 = pneg %p379
      // Predicated region
      $region57: #{tpu_custom_call.1} parent=5 // pred_check
        _
      $region58: #{tpu_custom_call.1} parent=5 // pred_check_branch
        %382 = sbr.rel (%p379) target = $region60
      $region59: #{tpu_custom_call.1} parent=5 // pred_region
        %s383 = ssub.s32 %s23, 1
        %s384 = sand.u32 %s57, 1
        %s385 = scalar_lea.sflag [#allocation7], %s384
        %s386 = sand.u32 %s57, 1
        %s387 = smul.addr %s386, 48
        %s388 = scalar_lea.vmem [#allocation6], %s387
        // Predicated region
        $region61: #{tpu_custom_call.1} parent=59 // pred_check
          %p389 = pneg %p70
        $region62: #{tpu_custom_call.1} parent=59 // pred_check_branch
          %391 = sbr.rel (%p389) target = $region64
        $region63: #{tpu_custom_call.1} parent=59 // pred_region
          %392 = dma.done %s385, 768
        $region64: #{tpu_custom_call.1} parent=59 // pred_fallthru
          _
        // Predicated region
        $region65: #{tpu_custom_call.1} parent=59 // pred_check
          %p393 = pneg %p133
        $region66: #{tpu_custom_call.1} parent=59 // pred_check_branch
          %395 = sbr.rel (%p393) target = $region68
        $region67: #{tpu_custom_call.1} parent=59 // pred_region
          %396 = dma.done [#allocation10], 384
        $region68: #{tpu_custom_call.1} parent=59 // pred_fallthru
          _
        // Predicated region
        $region69: #{tpu_custom_call.1} parent=59 // pred_check
          %p397 = pneg %p154
        $region70: #{tpu_custom_call.1} parent=59 // pred_check_branch
          %399 = sbr.rel (%p397) target = $region72
        $region71: #{tpu_custom_call.1} parent=59 // pred_region
          %400 = dma.done [#allocation10], 384
        $region72: #{tpu_custom_call.1} parent=59 // pred_fallthru
          _
        %s401 = sand.u32 %s57, 1
        %s402 = scalar_lea.sflag [#allocation7], %s401
        %s403 = sand.u32 %s57, 1
        %s404 = smul.addr %s403, 48
        %s405 = scalar_lea.vmem [#allocation6], %s404
        %p406 = pneg %p70
        %p407 = pneg %p67
        %p408 = pneg %p91
        %p409 = pneg %p88
        %p410 = pneg %p112
        %p411 = pneg %p109
        %p412 = pneg %p133
        %p413 = pneg %p130
        %p414 = pneg %p154
        %p415 = pneg %p151
        %p416 = pneg %p175
        %p417 = pneg %p172
        %p418 = pneg %p196
        %p419 = pneg %p193
        %p420 = pneg %p217
        %p421 = pneg %p214
        %p422 = pneg %p238
        %p423 = pneg %p235
        %p424 = pneg %p259
        %p425 = pneg %p256
        %p426 = pneg %p289
        %p427 = pneg %p286
        %s428 = sand.u32 %s276, 1
        %s429 = scalar_lea.sflag [#allocation8], %s428
        %s430 = sand.u32 %s276, 1
        %s431 = smul.addr %s430, 48
        %s432 = scalar_lea.vmem [#allocation12], %s431
        %s433 = smul.u32 %s35, %s34
        %v435 = vld [vmem:[%s388] sm:$0xff]
        %v436 = vld [vmem:[%s388 + $0x8] sm:$0xff]
        %v437 = vld [vmem:[%s388 + $0x10] sm:$0xff]
        %v438 = vld [vmem:[%s388 + $0x18] sm:$0xff]
        %v439 = vld [vmem:[%s388 + $0x20] sm:$0xff]
        %v440 = vld [vmem:[%s388 + $0x28] sm:$0xff]
        %v441 = vadd.f32 %v435, %v436
        %v442 = vadd.f32 %v441, %v437
        %v443 = vadd.f32 %v442, %v438
        %v444 = vadd.f32 %v443, %v439
        %v445 = vadd.f32 %v444, %v440
        %v446 = vrot.slane %v445, 4
        %v447 = vadd.f32 %v445, %v446
        %v448 = vrot.slane %v447, 2
        %v449 = vadd.f32 %v447, %v448
        %v450 = vrot.slane %v449, 1
        %v451 = vadd.f32 %v449, %v450
        %v452 = vmul.f32 %v435, %v435
        %v453 = vmul.f32 %v436, %v436
        %v454 = vmul.f32 %v437, %v437
        %v455 = vmul.f32 %v438, %v438
        %v456 = vmul.f32 %v439, %v439
        %v457 = vmul.f32 %v440, %v440
        %v458 = vadd.f32 %v452, %v453
        %v459 = vadd.f32 %v458, %v454
        %v460 = vadd.f32 %v459, %v455
        %v461 = vadd.f32 %v460, %v456
        %v462 = vadd.f32 %v461, %v457
        %v463 = vrot.slane %v462, 4
        %v464 = vadd.f32 %v462, %v463
        %v465 = vrot.slane %v464, 2
        %v466 = vadd.f32 %v464, %v465
        %v467 = vrot.slane %v466, 1
        %v468 = vadd.f32 %v466, %v467
        %v469 = vmul.f32 %v451, 0.020833334
        %v470 = vmul.f32 %v468, 0.020833334
        %v471 = vmul.f32 %v469, %v469
        %v472 = vsub.f32 %v470, %v471
        %v473 = vsub.f32 %v435, %v469
        %v474 = vsub.f32 %v436, %v469
        %v475 = vsub.f32 %v437, %v469
        %v476 = vsub.f32 %v438, %v469
        %v477 = vsub.f32 %v439, %v469
        %v478 = vsub.f32 %v440, %v469
        %v479 = vadd.f32 %v472, 1e-05
        %v480 = vrsqrt.pop %v479
        %v481 = vmul.f32 %v473, %v480
        %v482 = vmul.f32 %v474, %v480
        %v483 = vmul.f32 %v475, %v480
        %v484 = vmul.f32 %v476, %v480
        %v485 = vmul.f32 %v477, %v480
        %v486 = vmul.f32 %v478, %v480
        %v487 = vpack.c.bf16 %v482, %v481
        %v488 = vpack.c.bf16 %v484, %v483
        %v489 = vpack.c.bf16 %v486, %v485
        %p490 = scmp.eq.s32.totalorder %s34, 0
        // Predicated region
        $region73: #{tpu_custom_call.1} parent=59 // pred_check
          %p491 = pneg %p490
        $region74: #{tpu_custom_call.1} parent=59 // pred_check_branch
          %493 = sbr.rel (%p491) target = $region76
        $region75: #{tpu_custom_call.1} parent=59 // pred_region
          %p494 = scmp.eq.s32.totalorder %s35, 0
          // Predicated region
          $region77: #{tpu_custom_call.1} parent=75 // pred_check
            %p495 = pneg %p494
          $region78: #{tpu_custom_call.1} parent=75 // pred_check_branch
            %497 = sbr.rel (%p495) target = $region80
          $region79: #{tpu_custom_call.1} parent=75 // pred_region
            %vm498 = vcmask 392192
            %499 = vst.msk [vmem:[#allocation2] sm:$0xff] %vm498, 0.0
            %500 = vst.msk [vmem:[#allocation2 + $0x8] sm:$0xff] %vm498, 0.0
            %501 = vst.msk [vmem:[#allocation2 + $0x10] sm:$0xff] %vm498, 0.0
            %502 = vst.msk [vmem:[#allocation2 + $0x18] sm:$0xff] %vm498, 0.0
            %503 = vst.msk [vmem:[#allocation2 + $0x20] sm:$0xff] %vm498, 0.0
            %504 = vst.msk [vmem:[#allocation2 + $0x28] sm:$0xff] %vm498, 0.0
            %vm505 = vcmask 7168
            %506 = vst.msk [vmem:[#allocation3] sm:$0xff] %vm505, 0.0
            %507 = vst.msk [vmem:[#allocation3 + $0x8] sm:$0xff] %vm505, 0.0
            %508 = vst.msk [vmem:[#allocation3 + $0x10] sm:$0xff] %vm505, 0.0
            %509 = vst.msk [vmem:[#allocation3 + $0x18] sm:$0xff] %vm505, 0.0
            %510 = vst.msk [vmem:[#allocation3 + $0x20] sm:$0xff] %vm505, 0.0
            %511 = vst.msk [vmem:[#allocation3 + $0x28] sm:$0xff] %vm505, 0.0
            %vm512 = vcmask 385024
            %513 = vst.msk [vmem:[#allocation4] sm:$0x1] %vm512, 0.0
          $region80: #{tpu_custom_call.1} parent=75 // pred_fallthru
            _
          %v514 = vld [vmem:[%s1] sm:$0xf]
          %v515 = vld [vmem:[%s1 + $0x4] sm:$0xf]
          %v516 = vld [vmem:[%s1 + $0x8] sm:$0xf]
          %v517 = vld [vmem:[%s1 + $0xc] sm:$0xf]
          %v518 = vld [vmem:[%s1 + $0x10] sm:$0xf]
          %v519 = vld [vmem:[%s1 + $0x14] sm:$0xf]
          %v520 = vld [vmem:[%s5] sm:$0xff]
          %v521 = vld [vmem:[%s5 + $0x8] sm:$0xff]
          %v522 = vld [vmem:[%s5 + $0x10] sm:$0xff]
          %v523 = vld [vmem:[%s5 + $0x18] sm:$0xff]
          %v524 = vld [vmem:[%s5 + $0x20] sm:$0xff]
          %v525 = vld [vmem:[%s5 + $0x28] sm:$0xff]
          %527 = vset.pattern.permute.xlu0 0
          %528 = vperm.xlu0 %527, %v520
          %v529 = vpop.permute.xlu0 %528
          %532 = vset.pattern.permute.xlu0 0
          %533 = vperm.xlu0 %532, %v521
          %v534 = vpop.permute.xlu0 %533
          %537 = vset.pattern.permute.xlu0 0
          %538 = vperm.xlu0 %537, %v522
          %v539 = vpop.permute.xlu0 %538
          %542 = vset.pattern.permute.xlu0 0
          %543 = vperm.xlu0 %542, %v523
          %v544 = vpop.permute.xlu0 %543
          %547 = vset.pattern.permute.xlu0 0
          %548 = vperm.xlu0 %547, %v524
          %v549 = vpop.permute.xlu0 %548
          %552 = vset.pattern.permute.xlu0 0
          %553 = vperm.xlu0 %552, %v525
          %v554 = vpop.permute.xlu0 %553
          %v562 = vunpack.c.l.b16 %v514
          %v563 = vunpack.c.l.b16 %v515
          %v564 = vunpack.c.l.b16 %v516
          %v565 = vunpack.c.l.b16 %v517
          %v566 = vunpack.c.l.b16 %v518
          %v567 = vunpack.c.l.b16 %v519
          %v568 = vpack.c.b16 %v563, %v562
          %v569 = vpack.c.b16 %v565, %v564
          %v570 = vpack.c.b16 %v567, %v566
          %vm571 = vcmask 392192
          %v573 = vsel %vm571, %v568, 0
          %v576 = vsel %vm571, %v569, 0
          %v579 = vsel %vm571, %v570, 0
          %581 = vmatprep.subr.bf16.mxu0 0
          %582 = vmatpush1.bf16.msra.mxu0 %v487
          %583 = vmatprep.subr.bf16.mxu0 0
          %584 = vmatpush1.bf16.msra.mxu0 %v488
          %585 = vmatprep.subr.bf16.mxu0 0
          %586 = vmatpush1.bf16.msra.mxu0 %v489
          %587 = vmatprep.subr.bf16.mxu0 0
          %588 = vmatpush1.bf16.msra.mxu0 0
          %589 = vmatprep.subr.bf16.mxu0 0
          %590 = vmatpush1.bf16.msra.mxu0 0
          %591 = vmatprep.subr.bf16.mxu0 0
          %592 = vmatpush1.bf16.msra.mxu0 0
          %593 = vmatprep.subr.bf16.mxu0 0
          %594 = vmatpush1.bf16.msra.mxu0 0
          %595 = vmatprep.subr.bf16.mxu0 0
          %596 = vmatpush1.bf16.msra.mxu0 0
          %597 = vmatprep.subr.bf16.mxu0 0
          %598 = vmatpush1.bf16.msra.mxu0 0
          %599 = vmatprep.subr.bf16.mxu0 0
          %600 = vmatpush1.bf16.msra.mxu0 0
          %601 = vmatprep.subr.bf16.mxu0 0
          %602 = vmatpush1.bf16.msra.mxu0 0
          %603 = vmatprep.subr.bf16.mxu0 0
          %604 = vmatpush1.bf16.msra.mxu0 0
          %605 = vmatprep.subr.bf16.mxu0 0
          %606 = vmatpush1.bf16.msra.mxu0 0
          %607 = vmatprep.subr.bf16.mxu0 0
          %608 = vmatpush1.bf16.msra.mxu0 0
          %609 = vmatprep.subr.bf16.mxu0 0
          %610 = vmatpush1.bf16.msra.mxu0 0
          %611 = vmatprep.subr.bf16.mxu0 0
          %612 = vmatpush1.bf16.msra.mxu0 0
          %613 = vmatprep.mubr.bf16.mxu0 0
          %614 = vmatmul.mubr.bf16.gmra.mrb[0].mxu0 %v573
          %v615 = vpop.f32.mrb[0].mxu0
          %v616 = vadd.f32 %v529, %v615
          %v617 = vpop.f32.mrb[0].mxu0
          %v618 = vpop.f32.mrb[0].mxu0
          %v619 = vadd.f32 %v534, %v618
          %v620 = vpop.f32.mrb[0].mxu0
          %621 = vmatprep.mubr.bf16.mxu0 0
          %622 = vmatmul.mubr.bf16.gmra.mrb[0].mxu0 %v576
          %v623 = vpop.f32.mrb[0].mxu0
          %v624 = vadd.f32 %v539, %v623
          %v625 = vpop.f32.mrb[0].mxu0
          %v626 = vpop.f32.mrb[0].mxu0
          %v627 = vadd.f32 %v544, %v626
          %v628 = vpop.f32.mrb[0].mxu0
          %629 = vmatprep.mubr.bf16.mxu0 0
          %630 = vmatmul.mubr.bf16.gmra.mrb[0].mxu0 %v579
          %v631 = vpop.f32.mrb[0].mxu0
          %v632 = vadd.f32 %v549, %v631
          %v633 = vpop.f32.mrb[0].mxu0
          %v634 = vpop.f32.mrb[0].mxu0
          %v635 = vadd.f32 %v554, %v634
          %v636 = vpop.f32.mrb[0].mxu0
          %637 = vdwg.mxu0
          %v638 = vld [vmem:[%s2] sm:$0xf]
          %v639 = vld [vmem:[%s2 + $0x4] sm:$0xf]
          %v640 = vld [vmem:[%s2 + $0x8] sm:$0xf]
          %v641 = vld [vmem:[%s2 + $0xc] sm:$0xf]
          %v642 = vld [vmem:[%s2 + $0x10] sm:$0xf]
          %v643 = vld [vmem:[%s2 + $0x14] sm:$0xf]
          %v644 = vld [vmem:[%s6] sm:$0xff]
          %v645 = vld [vmem:[%s6 + $0x8] sm:$0xff]
          %v646 = vld [vmem:[%s6 + $0x10] sm:$0xff]
          %v647 = vld [vmem:[%s6 + $0x18] sm:$0xff]
          %v648 = vld [vmem:[%s6 + $0x20] sm:$0xff]
          %v649 = vld [vmem:[%s6 + $0x28] sm:$0xff]
          %651 = vset.pattern.permute.xlu0 0
          %652 = vperm.xlu0 %651, %v644
          %v653 = vpop.permute.xlu0 %652
          %656 = vset.pattern.permute.xlu0 0
          %657 = vperm.xlu0 %656, %v645
          %v658 = vpop.permute.xlu0 %657
          %661 = vset.pattern.permute.xlu0 0
          %662 = vperm.xlu0 %661, %v646
          %v663 = vpop.permute.xlu0 %662
          %666 = vset.pattern.permute.xlu0 0
          %667 = vperm.xlu0 %666, %v647
          %v668 = vpop.permute.xlu0 %667
          %671 = vset.pattern.permute.xlu0 0
          %672 = vperm.xlu0 %671, %v648
          %v673 = vpop.permute.xlu0 %672
          %676 = vset.pattern.permute.xlu0 0
          %677 = vperm.xlu0 %676, %v649
          %v678 = vpop.permute.xlu0 %677
          %v686 = vunpack.c.l.b16 %v638
          %v687 = vunpack.c.l.b16 %v639
          %v688 = vunpack.c.l.b16 %v640
          %v689 = vunpack.c.l.b16 %v641
          %v690 = vunpack.c.l.b16 %v642
          %v691 = vunpack.c.l.b16 %v643
          %v692 = vpack.c.b16 %v687, %v686
          %v693 = vpack.c.b16 %v689, %v688
          %v694 = vpack.c.b16 %v691, %v690
          %v696 = vsel %vm571, %v692, 0
          %v699 = vsel %vm571, %v693, 0
          %v702 = vsel %vm571, %v694, 0
          %704 = vmatprep.subr.bf16.mxu0 0
          %705 = vmatpush1.bf16.msra.mxu0 %v487
          %706 = vmatprep.subr.bf16.mxu0 0
          %707 = vmatpush1.bf16.msra.mxu0 %v488
          %708 = vmatprep.subr.bf16.mxu0 0
          %709 = vmatpush1.bf16.msra.mxu0 %v489
          %710 = vmatprep.subr.bf16.mxu0 0
          %711 = vmatpush1.bf16.msra.mxu0 0
          %712 = vmatprep.subr.bf16.mxu0 0
          %713 = vmatpush1.bf16.msra.mxu0 0
          %714 = vmatprep.subr.bf16.mxu0 0
          %715 = vmatpush1.bf16.msra.mxu0 0
          %716 = vmatprep.subr.bf16.mxu0 0
          %717 = vmatpush1.bf16.msra.mxu0 0
          %718 = vmatprep.subr.bf16.mxu0 0
          %719 = vmatpush1.bf16.msra.mxu0 0
          %720 = vmatprep.subr.bf16.mxu0 0
          %721 = vmatpush1.bf16.msra.mxu0 0
          %722 = vmatprep.subr.bf16.mxu0 0
          %723 = vmatpush1.bf16.msra.mxu0 0
          %724 = vmatprep.subr.bf16.mxu0 0
          %725 = vmatpush1.bf16.msra.mxu0 0
          %726 = vmatprep.subr.bf16.mxu0 0
          %727 = vmatpush1.bf16.msra.mxu0 0
          %728 = vmatprep.subr.bf16.mxu0 0
          %729 = vmatpush1.bf16.msra.mxu0 0
          %730 = vmatprep.subr.bf16.mxu0 0
          %731 = vmatpush1.bf16.msra.mxu0 0
          %732 = vmatprep.subr.bf16.mxu0 0
          %733 = vmatpush1.bf16.msra.mxu0 0
          %734 = vmatprep.subr.bf16.mxu0 0
          %735 = vmatpush1.bf16.msra.mxu0 0
          %736 = vmatprep.mubr.bf16.mxu0 0
          %737 = vmatmul.mubr.bf16.gmra.mrb[0].mxu0 %v696
          %v738 = vpop.f32.mrb[0].mxu0
          %v739 = vadd.f32 %v653, %v738
          %v740 = vpop.f32.mrb[0].mxu0
          %v741 = vpop.f32.mrb[0].mxu0
          %v742 = vadd.f32 %v658, %v741
          %v743 = vpop.f32.mrb[0].mxu0
          %744 = vmatprep.mubr.bf16.mxu0 0
          %745 = vmatmul.mubr.bf16.gmra.mrb[0].mxu0 %v699
          %v746 = vpop.f32.mrb[0].mxu0
          %v747 = vadd.f32 %v663, %v746
          %v748 = vpop.f32.mrb[0].mxu0
          %v749 = vpop.f32.mrb[0].mxu0
          %v750 = vadd.f32 %v668, %v749
          %v751 = vpop.f32.mrb[0].mxu0
          %752 = vmatprep.mubr.bf16.mxu0 0
          %753 = vmatmul.mubr.bf16.gmra.mrb[0].mxu0 %v702
          %v754 = vpop.f32.mrb[0].mxu0
          %v755 = vadd.f32 %v673, %v754
          %v756 = vpop.f32.mrb[0].mxu0
          %v757 = vpop.f32.mrb[0].mxu0
          %v758 = vadd.f32 %v678, %v757
          %v759 = vpop.f32.mrb[0].mxu0
          %760 = vdwg.mxu0
          %v761 = vld [vmem:[#allocation3] sm:$0xff]
          %v762 = vld [vmem:[#allocation3 + $0x8] sm:$0xff]
          %v763 = vld [vmem:[#allocation3 + $0x10] sm:$0xff]
          %v764 = vld [vmem:[#allocation3 + $0x18] sm:$0xff]
          %v765 = vld [vmem:[#allocation3 + $0x20] sm:$0xff]
          %v766 = vld [vmem:[#allocation3 + $0x28] sm:$0xff]
          %v767 = vmul.f32 %v616, %v616
          %v768 = vmul.f32 %v619, %v619
          %v769 = vmul.f32 %v624, %v624
          %v770 = vmul.f32 %v627, %v627
          %v771 = vmul.f32 %v632, %v632
          %v772 = vmul.f32 %v635, %v635
          %773 = vadd.xlane.f32.xlu0 %v767
          %v774 = vpop.xlane.xlu0 %773
          %775 = vadd.xlane.f32.xlu0 %v768
          %v776 = vpop.xlane.xlu0 %775
          %777 = vadd.xlane.f32.xlu0 %v769
          %v778 = vpop.xlane.xlu0 %777
          %779 = vadd.xlane.f32.xlu0 %v770
          %v780 = vpop.xlane.xlu0 %779
          %781 = vadd.xlane.f32.xlu0 %v771
          %v782 = vpop.xlane.xlu0 %781
          %783 = vadd.xlane.f32.xlu0 %v772
          %v784 = vpop.xlane.xlu0 %783
          %v785 = vadd.f32 %v761, %v774
          %v786 = vadd.f32 %v762, %v776
          %v787 = vadd.f32 %v763, %v778
          %v788 = vadd.f32 %v764, %v780
          %v789 = vadd.f32 %v765, %v782
          %v790 = vadd.f32 %v766, %v784
          %vm791 = vcmask 7168
          %792 = vst.msk [vmem:[#allocation3] sm:$0xff] %vm791, %v785
          %793 = vst.msk [vmem:[#allocation3 + $0x8] sm:$0xff] %vm791, %v786
          %794 = vst.msk [vmem:[#allocation3 + $0x10] sm:$0xff] %vm791, %v787
          %795 = vst.msk [vmem:[#allocation3 + $0x18] sm:$0xff] %vm791, %v788
          %796 = vst.msk [vmem:[#allocation3 + $0x20] sm:$0xff] %vm791, %v789
          %797 = vst.msk [vmem:[#allocation3 + $0x28] sm:$0xff] %vm791, %v790
          %v798 = vmul.f32 %v739, %v739
          %v799 = vmul.f32 %v742, %v742
          %v800 = vmul.f32 %v747, %v747
          %v801 = vmul.f32 %v750, %v750
          %v802 = vmul.f32 %v755, %v755
          %v803 = vmul.f32 %v758, %v758
          %v804 = vld [vmem:[#allocation4] sm:$0x1]
          %805 = vmatprep.subr.mxu0 0.0
          %806 = vmatpush1.xpose.msra.mxu0 %v798
          %807 = vmatprep.subr.mxu0 0.0
          %808 = vmatpush1.xpose.msra.mxu0 %v799
          %809 = vmatprep.subr.mxu0 0.0
          %810 = vmatpush1.xpose.msra.mxu0 %v800
          %811 = vmatprep.subr.mxu0 0.0
          %812 = vmatpush1.xpose.msra.mxu0 %v801
          %813 = vmatprep.subr.mxu0 0.0
          %814 = vmatpush1.xpose.msra.mxu0 %v802
          %815 = vmatprep.subr.mxu0 0.0
          %816 = vmatpush1.xpose.msra.mxu0 %v803
          %817 = vmatprep.subr.mxu0 0.0
          %818 = vmatpush1.xpose.msra.mxu0 0.0
          %819 = vmatprep.subr.mxu0 0.0
          %820 = vmatpush1.xpose.msra.mxu0 0.0
          %821 = vmatprep.subr.mxu0 0.0
          %822 = vmatpush1.xpose.msra.mxu0 0.0
          %823 = vmatprep.subr.mxu0 0.0
          %824 = vmatpush1.xpose.msra.mxu0 0.0
          %825 = vmatprep.subr.mxu0 0.0
          %826 = vmatpush1.xpose.msra.mxu0 0.0
          %827 = vmatprep.subr.mxu0 0.0
          %828 = vmatpush1.xpose.msra.mxu0 0.0
          %829 = vmatprep.subr.mxu0 0.0
          %830 = vmatpush1.xpose.msra.mxu0 0.0
          %831 = vmatprep.subr.mxu0 0.0
          %832 = vmatpush1.xpose.msra.mxu0 0.0
          %833 = vmatprep.subr.mxu0 0.0
          %834 = vmatpush1.xpose.msra.mxu0 0.0
          %835 = vmatprep.subr.mxu0 0.0
          %836 = vmatpush1.xpose.msra.mxu0 0.0
          %837 = vmatprep.subr.mxu0 0.0
          %838 = vmatpush1.xpose.msra.mxu0 0.0
          %839 = vmatprep.subr.mxu0 0.0
          %840 = vmatpush1.xpose.msra.mxu0 0.0
          %841 = vmatprep.subr.mxu0 0.0
          %842 = vmatpush1.xpose.msra.mxu0 0.0
          %843 = vmatprep.subr.mxu0 0.0
          %844 = vmatpush1.xpose.msra.mxu0 0.0
          %845 = vmatprep.subr.mxu0 0.0
          %846 = vmatpush1.xpose.msra.mxu0 0.0
          %847 = vmatprep.subr.mxu0 0.0
          %848 = vmatpush1.xpose.msra.mxu0 0.0
          %849 = vmatprep.subr.mxu0 0.0
          %850 = vmatpush1.xpose.msra.mxu0 0.0
          %851 = vmatprep.subr.mxu0 0.0
          %852 = vmatpush1.xpose.msra.mxu0 0.0
          %853 = vmatprep.subr.mxu0 0.0
          %854 = vmatpush1.xpose.msra.mxu0 0.0
          %855 = vmatprep.subr.mxu0 0.0
          %856 = vmatpush1.xpose.msra.mxu0 0.0
          %857 = vmatprep.subr.mxu0 0.0
          %858 = vmatpush1.xpose.msra.mxu0 0.0
          %859 = vmatprep.subr.mxu0 0.0
          %860 = vmatpush1.xpose.msra.mxu0 0.0
          %861 = vmatprep.subr.mxu0 0.0
          %862 = vmatpush1.xpose.msra.mxu0 0.0
          %863 = vmatprep.subr.mxu0 0.0
          %864 = vmatpush1.xpose.msra.mxu0 0.0
          %865 = vmatprep.subr.mxu0 0.0
          %866 = vmatpush1.xpose.msra.mxu0 0.0
          %867 = vmatprep.subr.mxu0 0.0
          %868 = vmatpush1.xpose.msra.mxu0 0.0
          %869 = vmatprep.mubr.f32.mxu0 0.0
          %870 = vmatmul.mubr.f32.gmra.mrb[0].mxu0 1.0
          %v871 = vpop.f32.mrb[0].mxu0
          %v872 = vadd.f32 0.0, %v871
          %v873 = vpop.f32.mrb[0].mxu0
          %874 = vdwg.mxu0
          %v875 = vadd.f32 %v804, %v872
          %vm876 = vcmask 385024
          %877 = vst.msk [vmem:[#allocation4] sm:$0x1] %vm876, %v875
          %v878 = vld [vmem:[#allocation2] sm:$0xff]
          %v879 = vld [vmem:[#allocation2 + $0x8] sm:$0xff]
          %v880 = vld [vmem:[#allocation2 + $0x10] sm:$0xff]
          %v881 = vld [vmem:[#allocation2 + $0x18] sm:$0xff]
          %v882 = vld [vmem:[#allocation2 + $0x20] sm:$0xff]
          %v883 = vld [vmem:[#allocation2 + $0x28] sm:$0xff]
          %884 = vmatprep.subr.mxu0 0.0
          %885 = vmatpush1.xpose.msra.mxu0 %v739
          %886 = vmatprep.subr.mxu0 0.0
          %887 = vmatpush1.xpose.msra.mxu0 %v742
          %888 = vmatprep.subr.mxu0 0.0
          %889 = vmatpush1.xpose.msra.mxu0 %v747
          %890 = vmatprep.subr.mxu0 0.0
          %891 = vmatpush1.xpose.msra.mxu0 %v750
          %892 = vmatprep.subr.mxu0 0.0
          %893 = vmatpush1.xpose.msra.mxu0 %v755
          %894 = vmatprep.subr.mxu0 0.0
          %895 = vmatpush1.xpose.msra.mxu0 %v758
          %896 = vmatprep.subr.mxu0 0.0
          %897 = vmatpush1.xpose.msra.mxu0 0.0
          %898 = vmatprep.subr.mxu0 0.0
          %899 = vmatpush1.xpose.msra.mxu0 0.0
          %900 = vmatprep.subr.mxu0 0.0
          %901 = vmatpush1.xpose.msra.mxu0 0.0
          %902 = vmatprep.subr.mxu0 0.0
          %903 = vmatpush1.xpose.msra.mxu0 0.0
          %904 = vmatprep.subr.mxu0 0.0
          %905 = vmatpush1.xpose.msra.mxu0 0.0
          %906 = vmatprep.subr.mxu0 0.0
          %907 = vmatpush1.xpose.msra.mxu0 0.0
          %908 = vmatprep.subr.mxu0 0.0
          %909 = vmatpush1.xpose.msra.mxu0 0.0
          %910 = vmatprep.subr.mxu0 0.0
          %911 = vmatpush1.xpose.msra.mxu0 0.0
          %912 = vmatprep.subr.mxu0 0.0
          %913 = vmatpush1.xpose.msra.mxu0 0.0
          %914 = vmatprep.subr.mxu0 0.0
          %915 = vmatpush1.xpose.msra.mxu0 0.0
          %916 = vmatprep.subr.mxu0 0.0
          %917 = vmatpush1.xpose.msra.mxu0 0.0
          %918 = vmatprep.subr.mxu0 0.0
          %919 = vmatpush1.xpose.msra.mxu0 0.0
          %920 = vmatprep.subr.mxu0 0.0
          %921 = vmatpush1.xpose.msra.mxu0 0.0
          %922 = vmatprep.subr.mxu0 0.0
          %923 = vmatpush1.xpose.msra.mxu0 0.0
          %924 = vmatprep.subr.mxu0 0.0
          %925 = vmatpush1.xpose.msra.mxu0 0.0
          %926 = vmatprep.subr.mxu0 0.0
          %927 = vmatpush1.xpose.msra.mxu0 0.0
          %928 = vmatprep.subr.mxu0 0.0
          %929 = vmatpush1.xpose.msra.mxu0 0.0
          %930 = vmatprep.subr.mxu0 0.0
          %931 = vmatpush1.xpose.msra.mxu0 0.0
          %932 = vmatprep.subr.mxu0 0.0
          %933 = vmatpush1.xpose.msra.mxu0 0.0
          %934 = vmatprep.subr.mxu0 0.0
          %935 = vmatpush1.xpose.msra.mxu0 0.0
          %936 = vmatprep.subr.mxu0 0.0
          %937 = vmatpush1.xpose.msra.mxu0 0.0
          %938 = vmatprep.subr.mxu0 0.0
          %939 = vmatpush1.xpose.msra.mxu0 0.0
          %940 = vmatprep.subr.mxu0 0.0
          %941 = vmatpush1.xpose.msra.mxu0 0.0
          %942 = vmatprep.subr.mxu0 0.0
          %943 = vmatpush1.xpose.msra.mxu0 0.0
          %944 = vmatprep.subr.mxu0 0.0
          %945 = vmatpush1.xpose.msra.mxu0 0.0
          %946 = vmatprep.subr.mxu0 0.0
          %947 = vmatpush1.xpose.msra.mxu0 0.0
          %948 = vmatprep.mubr.f32.mxu0 0.0
          %949 = vmatmul.mubr.f32.gmra.mrb[0].mxu0 %v616
          %v950 = vpop.f32.mrb[0].mxu0
          %v951 = vadd.f32 0.0, %v950
          %v952 = vpop.f32.mrb[0].mxu0
          %953 = vmatprep.mubr.f32.mxu0 0.0
          %954 = vmatmul.mubr.f32.gmra.mrb[0].mxu0 %v619
          %v955 = vpop.f32.mrb[0].mxu0
          %v956 = vadd.f32 0.0, %v955
          %v957 = vpop.f32.mrb[0].mxu0
          %958 = vmatprep.mubr.f32.mxu0 0.0
          %959 = vmatmul.mubr.f32.gmra.mrb[0].mxu0 %v624
          %v960 = vpop.f32.mrb[0].mxu0
          %v961 = vadd.f32 0.0, %v960
          %v962 = vpop.f32.mrb[0].mxu0
          %963 = vmatprep.mubr.f32.mxu0 0.0
          %964 = vmatmul.mubr.f32.gmra.mrb[0].mxu0 %v627
          %v965 = vpop.f32.mrb[0].mxu0
          %v966 = vadd.f32 0.0, %v965
          %v967 = vpop.f32.mrb[0].mxu0
          %968 = vmatprep.mubr.f32.mxu0 0.0
          %969 = vmatmul.mubr.f32.gmra.mrb[0].mxu0 %v632
          %v970 = vpop.f32.mrb[0].mxu0
          %v971 = vadd.f32 0.0, %v970
          %v972 = vpop.f32.mrb[0].mxu0
          %973 = vmatprep.mubr.f32.mxu0 0.0
          %974 = vmatmul.mubr.f32.gmra.mrb[0].mxu0 %v635
          %v975 = vpop.f32.mrb[0].mxu0
          %v976 = vadd.f32 0.0, %v975
          %v977 = vpop.f32.mrb[0].mxu0
          %978 = vdwg.mxu0
          %v979 = vadd.f32 %v878, %v951
          %v980 = vadd.f32 %v879, %v956
          %v981 = vadd.f32 %v880, %v961
          %v982 = vadd.f32 %v881, %v966
          %v983 = vadd.f32 %v882, %v971
          %v984 = vadd.f32 %v883, %v976
          %985 = vst.msk [vmem:[#allocation2] sm:$0xff] %vm571, %v979
          %986 = vst.msk [vmem:[#allocation2 + $0x8] sm:$0xff] %vm571, %v980
          %987 = vst.msk [vmem:[#allocation2 + $0x10] sm:$0xff] %vm571, %v981
          %988 = vst.msk [vmem:[#allocation2 + $0x18] sm:$0xff] %vm571, %v982
          %989 = vst.msk [vmem:[#allocation2 + $0x20] sm:$0xff] %vm571, %v983
          %990 = vst.msk [vmem:[#allocation2 + $0x28] sm:$0xff] %vm571, %v984
          %991 = vst [vmem:[%s432] sm:$0xff] %v435
          %992 = vst [vmem:[%s432 + $0x8] sm:$0xff] %v436
          %993 = vst [vmem:[%s432 + $0x10] sm:$0xff] %v437
          %994 = vst [vmem:[%s432 + $0x18] sm:$0xff] %v438
          %995 = vst [vmem:[%s432 + $0x20] sm:$0xff] %v439
          %996 = vst [vmem:[%s432 + $0x28] sm:$0xff] %v440
        $region76: #{tpu_custom_call.1} parent=59 // pred_fallthru
          _
        %p997 = scmp.eq.s32.totalorder %s34, 1
        // Predicated region
        $region81: #{tpu_custom_call.1} parent=59 // pred_check
          %p998 = pneg %p997
        $region82: #{tpu_custom_call.1} parent=59 // pred_check_branch
          %1000 = sbr.rel (%p998) target = $region84
        $region83: #{tpu_custom_call.1} parent=59 // pred_region
          %p1001 = scmp.eq.s32.totalorder %s35, 0
          // Predicated region
          $region85: #{tpu_custom_call.1} parent=83 // pred_check
            %p1002 = pneg %p1001
          $region86: #{tpu_custom_call.1} parent=83 // pred_check_branch
            %1004 = sbr.rel (%p1002) target = $region88
          $region87: #{tpu_custom_call.1} parent=83 // pred_region
            %v1005 = vld [vmem:[#allocation3] sm:$0xff]
            %v1006 = vld [vmem:[#allocation3 + $0x8] sm:$0xff]
            %v1007 = vld [vmem:[#allocation3 + $0x10] sm:$0xff]
            %v1008 = vld [vmem:[#allocation3 + $0x18] sm:$0xff]
            %v1009 = vld [vmem:[#allocation3 + $0x20] sm:$0xff]
            %v1010 = vld [vmem:[#allocation3 + $0x28] sm:$0xff]
            %v1011 = vrsqrt.pop %v1005
            %v1012 = vmul.f32 %v1005, %v1011
            %vm1013 = vcmp.eq.f32.partialorder %v1005, inf
            %v1014 = vsel %vm1013, %v1005, %v1012
            %vm1015 = vcmp.eq.f32.partialorder %v1005, 0.0
            %v1016 = vand.u32 %v1005, 2147483648
            %v1017 = vsel %vm1015, %v1016, %v1014
            %v1018 = vrsqrt.pop %v1006
            %v1019 = vmul.f32 %v1006, %v1018
            %vm1020 = vcmp.eq.f32.partialorder %v1006, inf
            %v1021 = vsel %vm1020, %v1006, %v1019
            %vm1022 = vcmp.eq.f32.partialorder %v1006, 0.0
            %v1023 = vand.u32 %v1006, 2147483648
            %v1024 = vsel %vm1022, %v1023, %v1021
            %v1025 = vrsqrt.pop %v1007
            %v1026 = vmul.f32 %v1007, %v1025
            %vm1027 = vcmp.eq.f32.partialorder %v1007, inf
            %v1028 = vsel %vm1027, %v1007, %v1026
            %vm1029 = vcmp.eq.f32.partialorder %v1007, 0.0
            %v1030 = vand.u32 %v1007, 2147483648
            %v1031 = vsel %vm1029, %v1030, %v1028
            %v1032 = vrsqrt.pop %v1008
            %v1033 = vmul.f32 %v1008, %v1032
            %vm1034 = vcmp.eq.f32.partialorder %v1008, inf
            %v1035 = vsel %vm1034, %v1008, %v1033
            %vm1036 = vcmp.eq.f32.partialorder %v1008, 0.0
            %v1037 = vand.u32 %v1008, 2147483648
            %v1038 = vsel %vm1036, %v1037, %v1035
            %v1039 = vrsqrt.pop %v1009
            %v1040 = vmul.f32 %v1009, %v1039
            %vm1041 = vcmp.eq.f32.partialorder %v1009, inf
            %v1042 = vsel %vm1041, %v1009, %v1040
            %vm1043 = vcmp.eq.f32.partialorder %v1009, 0.0
            %v1044 = vand.u32 %v1009, 2147483648
            %v1045 = vsel %vm1043, %v1044, %v1042
            %v1046 = vrsqrt.pop %v1010
            %v1047 = vmul.f32 %v1010, %v1046
            %vm1048 = vcmp.eq.f32.partialorder %v1010, inf
            %v1049 = vsel %vm1048, %v1010, %v1047
            %vm1050 = vcmp.eq.f32.partialorder %v1010, 0.0
            %v1051 = vand.u32 %v1010, 2147483648
            %v1052 = vsel %vm1050, %v1051, %v1049
            %v1053 = vmax.f32 %v1017, 1e-12
            %v1054 = vmax.f32 %v1024, 1e-12
            %v1055 = vmax.f32 %v1031, 1e-12
            %v1056 = vmax.f32 %v1038, 1e-12
            %v1057 = vmax.f32 %v1045, 1e-12
            %v1058 = vmax.f32 %v1052, 1e-12
            %v1059 = vrcp.pop %v1053
            %v1060 = vrcp.pop %v1054
            %v1061 = vrcp.pop %v1055
            %v1062 = vrcp.pop %v1056
            %v1063 = vrcp.pop %v1057
            %v1064 = vrcp.pop %v1058
            %v1065 = vld [vmem:[#allocation4] sm:$0x1]
            %v1066 = vrsqrt.pop %v1065
            %v1067 = vmul.f32 %v1065, %v1066
            %vm1068 = vcmp.eq.f32.partialorder %v1065, inf
            %v1069 = vsel %vm1068, %v1065, %v1067
            %vm1070 = vcmp.eq.f32.partialorder %v1065, 0.0
            %v1071 = vand.u32 %v1065, 2147483648
            %v1072 = vsel %vm1070, %v1071, %v1069
            %v1073 = vmax.f32 %v1072, 1e-12
            %v1074 = vrcp.pop %v1073
            %v1075 = vld [vmem:[#allocation2] sm:$0xff]
            %v1076 = vld [vmem:[#allocation2 + $0x8] sm:$0xff]
            %v1077 = vld [vmem:[#allocation2 + $0x10] sm:$0xff]
            %v1078 = vld [vmem:[#allocation2 + $0x18] sm:$0xff]
            %v1079 = vld [vmem:[#allocation2 + $0x20] sm:$0xff]
            %v1080 = vld [vmem:[#allocation2 + $0x28] sm:$0xff]
            %1082 = vset.pattern.permute.xlu0 0
            %1083 = vperm.xlu0 %1082, %v1059
            %v1084 = vpop.permute.xlu0 %1083
            %1087 = vset.pattern.permute.xlu0 0
            %1088 = vperm.xlu0 %1087, %v1060
            %v1089 = vpop.permute.xlu0 %1088
            %1092 = vset.pattern.permute.xlu0 0
            %1093 = vperm.xlu0 %1092, %v1061
            %v1094 = vpop.permute.xlu0 %1093
            %1097 = vset.pattern.permute.xlu0 0
            %1098 = vperm.xlu0 %1097, %v1062
            %v1099 = vpop.permute.xlu0 %1098
            %1102 = vset.pattern.permute.xlu0 0
            %1103 = vperm.xlu0 %1102, %v1063
            %v1104 = vpop.permute.xlu0 %1103
            %1107 = vset.pattern.permute.xlu0 0
            %1108 = vperm.xlu0 %1107, %v1064
            %v1109 = vpop.permute.xlu0 %1108
            %v1111 = vmul.f32 %v1075, %v1084
            %v1112 = vmul.f32 %v1076, %v1089
            %v1113 = vmul.f32 %v1077, %v1094
            %v1114 = vmul.f32 %v1078, %v1099
            %v1115 = vmul.f32 %v1079, %v1104
            %v1116 = vmul.f32 %v1080, %v1109
            %v1118 = vlaneseq
            %v1119 = vshrl.u32 %v1118, 7
            %v1120 = vsub.s32 0, %v1119
            %v1121 = vrot.slane %v1074, %v1120
            %v1123 = vmul.f32 %v1111, %v1121
            %v1124 = vmul.f32 %v1112, %v1121
            %v1125 = vmul.f32 %v1113, %v1121
            %v1126 = vmul.f32 %v1114, %v1121
            %v1127 = vmul.f32 %v1115, %v1121
            %v1128 = vmul.f32 %v1116, %v1121
            %v1129 = vld [vmem:[%s8] sm:$0xff]
            %v1130 = vld [vmem:[%s8 + $0x8] sm:$0xff]
            %v1131 = vld [vmem:[%s8 + $0x10] sm:$0xff]
            %v1132 = vld [vmem:[%s8 + $0x18] sm:$0xff]
            %v1133 = vld [vmem:[%s8 + $0x20] sm:$0xff]
            %v1134 = vld [vmem:[%s8 + $0x28] sm:$0xff]
            %v1135 = vmul.f32 %v1123, %v1129
            %v1136 = vmul.f32 %v1124, %v1130
            %v1137 = vmul.f32 %v1125, %v1131
            %v1138 = vmul.f32 %v1126, %v1132
            %v1139 = vmul.f32 %v1127, %v1133
            %v1140 = vmul.f32 %v1128, %v1134
            %v1141 = vld [vmem:[%s9] sm:$0xff]
            %v1142 = vld [vmem:[%s9 + $0x8] sm:$0xff]
            %v1143 = vld [vmem:[%s9 + $0x10] sm:$0xff]
            %v1144 = vld [vmem:[%s9 + $0x18] sm:$0xff]
            %v1145 = vld [vmem:[%s9 + $0x20] sm:$0xff]
            %v1146 = vld [vmem:[%s9 + $0x28] sm:$0xff]
            %v1147 = vadd.f32 %v1135, %v1141
            %v1148 = vadd.f32 %v1136, %v1142
            %v1149 = vadd.f32 %v1137, %v1143
            %v1150 = vadd.f32 %v1138, %v1144
            %v1151 = vadd.f32 %v1139, %v1145
            %v1152 = vadd.f32 %v1140, %v1146
            %vm1153 = vcmask 392192
            %v1154 = vsel %vm1153, %v1147, -inf
            %1155 = vmax.xlane.f32.xlu0 %v1154
            %v1156 = vpop.xlane.xlu0 %1155
            %v1157 = vsel %vm1153, %v1148, -inf
            %1158 = vmax.xlane.f32.xlu0 %v1157
            %v1159 = vpop.xlane.xlu0 %1158
            %v1160 = vsel %vm1153, %v1149, -inf
            %1161 = vmax.xlane.f32.xlu0 %v1160
            %v1162 = vpop.xlane.xlu0 %1161
            %v1163 = vsel %vm1153, %v1150, -inf
            %1164 = vmax.xlane.f32.xlu0 %v1163
            %v1165 = vpop.xlane.xlu0 %1164
            %v1166 = vsel %vm1153, %v1151, -inf
            %1167 = vmax.xlane.f32.xlu0 %v1166
            %v1168 = vpop.xlane.xlu0 %1167
            %v1169 = vsel %vm1153, %v1152, -inf
            %1170 = vmax.xlane.f32.xlu0 %v1169
            %v1171 = vpop.xlane.xlu0 %1170
            %v1172 = vsub.f32 %v1147, %v1156
            %v1173 = vsub.f32 %v1148, %v1159
            %v1174 = vsub.f32 %v1149, %v1162
            %v1175 = vsub.f32 %v1150, %v1165
            %v1176 = vsub.f32 %v1151, %v1168
            %v1177 = vsub.f32 %v1152, %v1171
            %v1178 = vmul.f32 %v1172, 1.442695
            %v1179 = vpow.pop %v1178
            %v1180 = vmul.f32 %v1173, 1.442695
            %v1181 = vpow.pop %v1180
            %v1182 = vmul.f32 %v1174, 1.442695
            %v1183 = vpow.pop %v1182
            %v1184 = vmul.f32 %v1175, 1.442695
            %v1185 = vpow.pop %v1184
            %v1186 = vmul.f32 %v1176, 1.442695
            %v1187 = vpow.pop %v1186
            %v1188 = vmul.f32 %v1177, 1.442695
            %v1189 = vpow.pop %v1188
            %v1190 = vsel %vm1153, %v1179, 0.0
            %1191 = vadd.xlane.f32.xlu0 %v1190
            %v1192 = vpop.xlane.xlu0 %1191
            %v1193 = vsel %vm1153, %v1181, 0.0
            %1194 = vadd.xlane.f32.xlu0 %v1193
            %v1195 = vpop.xlane.xlu0 %1194
            %v1196 = vsel %vm1153, %v1183, 0.0
            %1197 = vadd.xlane.f32.xlu0 %v1196
            %v1198 = vpop.xlane.xlu0 %1197
            %v1199 = vsel %vm1153, %v1185, 0.0
            %1200 = vadd.xlane.f32.xlu0 %v1199
            %v1201 = vpop.xlane.xlu0 %1200
            %v1202 = vsel %vm1153, %v1187, 0.0
            %1203 = vadd.xlane.f32.xlu0 %v1202
            %v1204 = vpop.xlane.xlu0 %1203
            %v1205 = vsel %vm1153, %v1189, 0.0
            %1206 = vadd.xlane.f32.xlu0 %v1205
            %v1207 = vpop.xlane.xlu0 %1206
            %v1208 = vrcp.pop %v1192
            %v1209 = vrcp.pop %v1195
            %v1210 = vrcp.pop %v1198
            %v1211 = vrcp.pop %v1201
            %v1212 = vrcp.pop %v1204
            %v1213 = vrcp.pop %v1207
            %v1214 = vmul.f32 %v1179, %v1208
            %v1215 = vmul.f32 %v1181, %v1209
            %v1216 = vmul.f32 %v1183, %v1210
            %v1217 = vmul.f32 %v1185, %v1211
            %v1218 = vmul.f32 %v1187, %v1212
            %v1219 = vmul.f32 %v1189, %v1213
            %1220 = vst.msk [vmem:[#allocation5] sm:$0xff] %vm1153, %v1214
            %1221 = vst.msk [vmem:[#allocation5 + $0x8] sm:$0xff] %vm1153, %v1215
            %1222 = vst.msk [vmem:[#allocation5 + $0x10] sm:$0xff] %vm1153, %v1216
            %1223 = vst.msk [vmem:[#allocation5 + $0x18] sm:$0xff] %vm1153, %v1217
            %1224 = vst.msk [vmem:[#allocation5 + $0x20] sm:$0xff] %vm1153, %v1218
            %1225 = vst.msk [vmem:[#allocation5 + $0x28] sm:$0xff] %vm1153, %v1219
          $region88: #{tpu_custom_call.1} parent=83 // pred_fallthru
            _
          %v1226 = vld [vmem:[#allocation9] sm:$0xf]
          %v1227 = vld [vmem:[#allocation9 + $0x4] sm:$0xf]
          %v1228 = vld [vmem:[#allocation9 + $0x8] sm:$0xf]
          %v1229 = vld [vmem:[#allocation9 + $0xc] sm:$0xf]
          %v1230 = vld [vmem:[#allocation9 + $0x10] sm:$0xf]
          %v1231 = vld [vmem:[#allocation9 + $0x14] sm:$0xf]
          %v1232 = vld [vmem:[%s7] sm:$0xff]
          %v1233 = vld [vmem:[%s7 + $0x8] sm:$0xff]
          %v1234 = vld [vmem:[%s7 + $0x10] sm:$0xff]
          %v1235 = vld [vmem:[%s7 + $0x18] sm:$0xff]
          %v1236 = vld [vmem:[%s7 + $0x20] sm:$0xff]
          %v1237 = vld [vmem:[%s7 + $0x28] sm:$0xff]
          %1239 = vset.pattern.permute.xlu0 0
          %1240 = vperm.xlu0 %1239, %v1232
          %v1241 = vpop.permute.xlu0 %1240
          %1244 = vset.pattern.permute.xlu0 0
          %1245 = vperm.xlu0 %1244, %v1233
          %v1246 = vpop.permute.xlu0 %1245
          %1249 = vset.pattern.permute.xlu0 0
          %1250 = vperm.xlu0 %1249, %v1234
          %v1251 = vpop.permute.xlu0 %1250
          %1254 = vset.pattern.permute.xlu0 0
          %1255 = vperm.xlu0 %1254, %v1235
          %v1256 = vpop.permute.xlu0 %1255
          %1259 = vset.pattern.permute.xlu0 0
          %1260 = vperm.xlu0 %1259, %v1236
          %v1261 = vpop.permute.xlu0 %1260
          %1264 = vset.pattern.permute.xlu0 0
          %1265 = vperm.xlu0 %1264, %v1237
          %v1266 = vpop.permute.xlu0 %1265
          %v1274 = vunpack.c.l.b16 %v1226
          %v1275 = vunpack.c.l.b16 %v1227
          %v1276 = vunpack.c.l.b16 %v1228
          %v1277 = vunpack.c.l.b16 %v1229
          %v1278 = vunpack.c.l.b16 %v1230
          %v1279 = vunpack.c.l.b16 %v1231
          %v1280 = vpack.c.b16 %v1275, %v1274
          %v1281 = vpack.c.b16 %v1277, %v1276
          %v1282 = vpack.c.b16 %v1279, %v1278
          %vm1283 = vcmask 392192
          %v1285 = vsel %vm1283, %v1280, 0
          %v1288 = vsel %vm1283, %v1281, 0
          %v1291 = vsel %vm1283, %v1282, 0
          %1293 = vmatprep.subr.bf16.mxu0 0
          %1294 = vmatpush1.bf16.msra.mxu0 %v487
          %1295 = vmatprep.subr.bf16.mxu0 0
          %1296 = vmatpush1.bf16.msra.mxu0 %v488
          %1297 = vmatprep.subr.bf16.mxu0 0
          %1298 = vmatpush1.bf16.msra.mxu0 %v489
          %1299 = vmatprep.subr.bf16.mxu0 0
          %1300 = vmatpush1.bf16.msra.mxu0 0
          %1301 = vmatprep.subr.bf16.mxu0 0
          %1302 = vmatpush1.bf16.msra.mxu0 0
          %1303 = vmatprep.subr.bf16.mxu0 0
          %1304 = vmatpush1.bf16.msra.mxu0 0
          %1305 = vmatprep.subr.bf16.mxu0 0
          %1306 = vmatpush1.bf16.msra.mxu0 0
          %1307 = vmatprep.subr.bf16.mxu0 0
          %1308 = vmatpush1.bf16.msra.mxu0 0
          %1309 = vmatprep.subr.bf16.mxu0 0
          %1310 = vmatpush1.bf16.msra.mxu0 0
          %1311 = vmatprep.subr.bf16.mxu0 0
          %1312 = vmatpush1.bf16.msra.mxu0 0
          %1313 = vmatprep.subr.bf16.mxu0 0
          %1314 = vmatpush1.bf16.msra.mxu0 0
          %1315 = vmatprep.subr.bf16.mxu0 0
          %1316 = vmatpush1.bf16.msra.mxu0 0
          %1317 = vmatprep.subr.bf16.mxu0 0
          %1318 = vmatpush1.bf16.msra.mxu0 0
          %1319 = vmatprep.subr.bf16.mxu0 0
          %1320 = vmatpush1.bf16.msra.mxu0 0
          %1321 = vmatprep.subr.bf16.mxu0 0
          %1322 = vmatpush1.bf16.msra.mxu0 0
          %1323 = vmatprep.subr.bf16.mxu0 0
          %1324 = vmatpush1.bf16.msra.mxu0 0
          %1325 = vmatprep.mubr.bf16.mxu0 0
          %1326 = vmatmul.mubr.bf16.gmra.mrb[0].mxu0 %v1285
          %v1327 = vpop.f32.mrb[0].mxu0
          %v1328 = vadd.f32 %v1241, %v1327
          %v1329 = vpop.f32.mrb[0].mxu0
          %v1330 = vpop.f32.mrb[0].mxu0
          %v1331 = vadd.f32 %v1246, %v1330
          %v1332 = vpop.f32.mrb[0].mxu0
          %1333 = vmatprep.mubr.bf16.mxu0 0
          %1334 = vmatmul.mubr.bf16.gmra.mrb[0].mxu0 %v1288
          %v1335 = vpop.f32.mrb[0].mxu0
          %v1336 = vadd.f32 %v1251, %v1335
          %v1337 = vpop.f32.mrb[0].mxu0
          %v1338 = vpop.f32.mrb[0].mxu0
          %v1339 = vadd.f32 %v1256, %v1338
          %v1340 = vpop.f32.mrb[0].mxu0
          %1341 = vmatprep.mubr.bf16.mxu0 0
          %1342 = vmatmul.mubr.bf16.gmra.mrb[0].mxu0 %v1291
          %v1343 = vpop.f32.mrb[0].mxu0
          %v1344 = vadd.f32 %v1261, %v1343
          %v1345 = vpop.f32.mrb[0].mxu0
          %v1346 = vpop.f32.mrb[0].mxu0
          %v1347 = vadd.f32 %v1266, %v1346
          %v1348 = vpop.f32.mrb[0].mxu0
          %1349 = vdwg.mxu0
          %v1350 = vld [vmem:[#allocation5] sm:$0xff]
          %v1351 = vld [vmem:[#allocation5 + $0x8] sm:$0xff]
          %v1352 = vld [vmem:[#allocation5 + $0x10] sm:$0xff]
          %v1353 = vld [vmem:[#allocation5 + $0x18] sm:$0xff]
          %v1354 = vld [vmem:[#allocation5 + $0x20] sm:$0xff]
          %v1355 = vld [vmem:[#allocation5 + $0x28] sm:$0xff]
          %v1356 = vpack.c.bf16 %v1351, %v1350
          %v1357 = vpack.c.bf16 %v1353, %v1352
          %v1358 = vpack.c.bf16 %v1355, %v1354
          %v1359 = vpack.c.bf16 %v1331, %v1328
          %v1360 = vpack.c.bf16 %v1339, %v1336
          %v1361 = vpack.c.bf16 %v1347, %v1344
          %v1363 = vsel %vm1283, %v1356, 0
          %v1366 = vsel %vm1283, %v1357, 0
          %v1369 = vsel %vm1283, %v1358, 0
          %1371 = vmatprep.subr.bf16.mxu0 0
          %1372 = vmatpush1.bf16.msra.mxu0 %v1359
          %1373 = vmatprep.subr.bf16.mxu0 0
          %1374 = vmatpush1.bf16.msra.mxu0 %v1360
          %1375 = vmatprep.subr.bf16.mxu0 0
          %1376 = vmatpush1.bf16.msra.mxu0 %v1361
          %1377 = vmatprep.subr.bf16.mxu0 0
          %1378 = vmatpush1.bf16.msra.mxu0 0
          %1379 = vmatprep.subr.bf16.mxu0 0
          %1380 = vmatpush1.bf16.msra.mxu0 0
          %1381 = vmatprep.subr.bf16.mxu0 0
          %1382 = vmatpush1.bf16.msra.mxu0 0
          %1383 = vmatprep.subr.bf16.mxu0 0
          %1384 = vmatpush1.bf16.msra.mxu0 0
          %1385 = vmatprep.subr.bf16.mxu0 0
          %1386 = vmatpush1.bf16.msra.mxu0 0
          %1387 = vmatprep.subr.bf16.mxu0 0
          %1388 = vmatpush1.bf16.msra.mxu0 0
          %1389 = vmatprep.subr.bf16.mxu0 0
          %1390 = vmatpush1.bf16.msra.mxu0 0
          %1391 = vmatprep.subr.bf16.mxu0 0
          %1392 = vmatpush1.bf16.msra.mxu0 0
          %1393 = vmatprep.subr.bf16.mxu0 0
          %1394 = vmatpush1.bf16.msra.mxu0 0
          %1395 = vmatprep.subr.bf16.mxu0 0
          %1396 = vmatpush1.bf16.msra.mxu0 0
          %1397 = vmatprep.subr.bf16.mxu0 0
          %1398 = vmatpush1.bf16.msra.mxu0 0
          %1399 = vmatprep.subr.bf16.mxu0 0
          %1400 = vmatpush1.bf16.msra.mxu0 0
          %1401 = vmatprep.subr.bf16.mxu0 0
          %1402 = vmatpush1.bf16.msra.mxu0 0
          %1403 = vmatprep.mubr.bf16.mxu0 0
          %1404 = vmatmul.mubr.bf16.gmra.mrb[0].mxu0 %v1363
          %v1405 = vpop.f32.mrb[0].mxu0
          %v1406 = vadd.f32 0.0, %v1405
          %v1407 = vpop.f32.mrb[0].mxu0
          %v1408 = vpop.f32.mrb[0].mxu0
          %v1409 = vadd.f32 0.0, %v1408
          %v1410 = vpop.f32.mrb[0].mxu0
          %1411 = vmatprep.mubr.bf16.mxu0 0
          %1412 = vmatmul.mubr.bf16.gmra.mrb[0].mxu0 %v1366
          %v1413 = vpop.f32.mrb[0].mxu0
          %v1414 = vadd.f32 0.0, %v1413
          %v1415 = vpop.f32.mrb[0].mxu0
          %v1416 = vpop.f32.mrb[0].mxu0
          %v1417 = vadd.f32 0.0, %v1416
          %v1418 = vpop.f32.mrb[0].mxu0
          %1419 = vmatprep.mubr.bf16.mxu0 0
          %1420 = vmatmul.mubr.bf16.gmra.mrb[0].mxu0 %v1369
          %v1421 = vpop.f32.mrb[0].mxu0
          %v1422 = vadd.f32 0.0, %v1421
          %v1423 = vpop.f32.mrb[0].mxu0
          %v1424 = vpop.f32.mrb[0].mxu0
          %v1425 = vadd.f32 0.0, %v1424
          %v1426 = vpop.f32.mrb[0].mxu0
          %1427 = vdwg.mxu0
          %v1428 = vld [vmem:[#allocation11] sm:$0xf]
          %v1429 = vld [vmem:[#allocation11 + $0x4] sm:$0xf]
          %v1430 = vld [vmem:[#allocation11 + $0x8] sm:$0xf]
          %v1431 = vld [vmem:[#allocation11 + $0xc] sm:$0xf]
          %v1432 = vld [vmem:[#allocation11 + $0x10] sm:$0xf]
          %v1433 = vld [vmem:[#allocation11 + $0x14] sm:$0xf]
          %v1434 = vpack.c.bf16 %v1409, %v1406
          %v1435 = vpack.c.bf16 %v1417, %v1414
          %v1436 = vpack.c.bf16 %v1425, %v1422
          %v1443 = vunpack.c.l.b16 %v1428
          %v1444 = vunpack.c.l.b16 %v1429
          %v1445 = vunpack.c.l.b16 %v1430
          %v1446 = vunpack.c.l.b16 %v1431
          %v1447 = vunpack.c.l.b16 %v1432
          %v1448 = vunpack.c.l.b16 %v1433
          %v1449 = vpack.c.b16 %v1444, %v1443
          %v1450 = vpack.c.b16 %v1446, %v1445
          %v1451 = vpack.c.b16 %v1448, %v1447
          %v1453 = vsel %vm1283, %v1449, 0
          %v1456 = vsel %vm1283, %v1450, 0
          %v1459 = vsel %vm1283, %v1451, 0
          %1461 = vmatprep.subr.bf16.mxu0 0
          %1462 = vmatpush1.bf16.msra.mxu0 %v1434
          %1463 = vmatprep.subr.bf16.mxu0 0
          %1464 = vmatpush1.bf16.msra.mxu0 %v1435
          %1465 = vmatprep.subr.bf16.mxu0 0
          %1466 = vmatpush1.bf16.msra.mxu0 %v1436
          %1467 = vmatprep.subr.bf16.mxu0 0
          %1468 = vmatpush1.bf16.msra.mxu0 0
          %1469 = vmatprep.subr.bf16.mxu0 0
          %1470 = vmatpush1.bf16.msra.mxu0 0
          %1471 = vmatprep.subr.bf16.mxu0 0
          %1472 = vmatpush1.bf16.msra.mxu0 0
          %1473 = vmatprep.subr.bf16.mxu0 0
          %1474 = vmatpush1.bf16.msra.mxu0 0
          %1475 = vmatprep.subr.bf16.mxu0 0
          %1476 = vmatpush1.bf16.msra.mxu0 0
          %1477 = vmatprep.subr.bf16.mxu0 0
          %1478 = vmatpush1.bf16.msra.mxu0 0
          %1479 = vmatprep.subr.bf16.mxu0 0
          %1480 = vmatpush1.bf16.msra.mxu0 0
          %1481 = vmatprep.subr.bf16.mxu0 0
          %1482 = vmatpush1.bf16.msra.mxu0 0
          %1483 = vmatprep.subr.bf16.mxu0 0
          %1484 = vmatpush1.bf16.msra.mxu0 0
          %1485 = vmatprep.subr.bf16.mxu0 0
          %1486 = vmatpush1.bf16.msra.mxu0 0
          %1487 = vmatprep.subr.bf16.mxu0 0
          %1488 = vmatpush1.bf16.msra.mxu0 0
          %1489 = vmatprep.subr.bf16.mxu0 0
          %1490 = vmatpush1.bf16.msra.mxu0 0
          %1491 = vmatprep.subr.bf16.mxu0 0
          %1492 = vmatpush1.bf16.msra.mxu0 0
          %1493 = vmatprep.mubr.bf16.mxu0 0
          %1494 = vmatmul.mubr.bf16.gmra.mrb[0].mxu0 %v1453
          %v1495 = vpop.f32.mrb[0].mxu0
          %v1496 = vadd.f32 0.0, %v1495
          %v1497 = vpop.f32.mrb[0].mxu0
          %v1498 = vpop.f32.mrb[0].mxu0
          %v1499 = vadd.f32 0.0, %v1498
          %v1500 = vpop.f32.mrb[0].mxu0
          %1501 = vmatprep.mubr.bf16.mxu0 0
          %1502 = vmatmul.mubr.bf16.gmra.mrb[0].mxu0 %v1456
          %v1503 = vpop.f32.mrb[0].mxu0
          %v1504 = vadd.f32 0.0, %v1503
          %v1505 = vpop.f32.mrb[0].mxu0
          %v1506 = vpop.f32.mrb[0].mxu0
          %v1507 = vadd.f32 0.0, %v1506
          %v1508 = vpop.f32.mrb[0].mxu0
          %1509 = vmatprep.mubr.bf16.mxu0 0
          %1510 = vmatmul.mubr.bf16.gmra.mrb[0].mxu0 %v1459
          %v1511 = vpop.f32.mrb[0].mxu0
          %v1512 = vadd.f32 0.0, %v1511
          %v1513 = vpop.f32.mrb[0].mxu0
          %v1514 = vpop.f32.mrb[0].mxu0
          %v1515 = vadd.f32 0.0, %v1514
          %v1516 = vpop.f32.mrb[0].mxu0
          %1517 = vdwg.mxu0
          %v1518 = vadd.f32 %v435, %v1496
          %v1519 = vadd.f32 %v436, %v1499
          %v1520 = vadd.f32 %v437, %v1504
          %v1521 = vadd.f32 %v438, %v1507
          %v1522 = vadd.f32 %v439, %v1512
          %v1523 = vadd.f32 %v440, %v1515
          %1524 = vst [vmem:[%s432] sm:$0xff] %v1518
          %1525 = vst [vmem:[%s432 + $0x8] sm:$0xff] %v1519
          %1526 = vst [vmem:[%s432 + $0x10] sm:$0xff] %v1520
          %1527 = vst [vmem:[%s432 + $0x18] sm:$0xff] %v1521
          %1528 = vst [vmem:[%s432 + $0x20] sm:$0xff] %v1522
          %1529 = vst [vmem:[%s432 + $0x28] sm:$0xff] %v1523
        $region84: #{tpu_custom_call.1} parent=59 // pred_fallthru
          _
        %s1530 = sand.u32 %s276, 1
        %s1531 = scalar_lea.sflag [#allocation8], %s1530
        %s1532 = sand.u32 %s276, 1
        %s1533 = smul.addr %s1532, 48
        %s1534 = scalar_lea.vmem [#allocation12], %s1533
        // Predicated region
        $region89: #{tpu_custom_call.1} parent=59 // pred_check
          %p1535 = pneg %p286
        $region90: #{tpu_custom_call.1} parent=59 // pred_check_branch
          %1537 = sbr.rel (%p1535) target = $region92
        $region91: #{tpu_custom_call.1} parent=59 // pred_region
          %s1538 = smul.u32 %s35, %s34
          %s1540 = ssub.s32 768, 768
          %1541 = vsyncadd %s1531, %s1540
          %s1542 = smul.addr %s33, 12
          %s1543 = sadd.s32 %s1538, %s1542
          %s1544 = smul.addr %s1543, 128
          %s1545 = scalar_lea.hbm %s10, %s1544
          %s1546 = sshll.u32 %s1534, 4
          %s1547 = int_to_ptr.vmem [resolvable:$true] %s1546
          %1552 = dma.vmem_to_hbm [thread:$0]  %s1547, 768, %s1545, %s1531, 128, 256, 8
        $region92: #{tpu_custom_call.1} parent=59 // pred_fallthru
          _
      $region60: #{tpu_custom_call.1} parent=5 // pred_fallthru
        _
      %p1553 = scmp.le.s32.totalorder 2, %s23
      // Predicated region
      $region93: #{tpu_custom_call.1} parent=5 // pred_check
        %p1554 = pneg %p1553
      $region94: #{tpu_custom_call.1} parent=5 // pred_check_branch
        %1556 = sbr.rel (%p1554) target = $region96
      $region95: #{tpu_custom_call.1} parent=5 // pred_region
        %s1557 = ssub.s32 %s23, 2
        // Predicated region
        $region97: #{tpu_custom_call.1} parent=95 // pred_check
          %p1558 = pneg %p292
        $region98: #{tpu_custom_call.1} parent=95 // pred_check_branch
          %1560 = sbr.rel (%p1558) target = $region100
        $region99: #{tpu_custom_call.1} parent=95 // pred_region
          %s1561 = sand.u32 %s277, 1
          %s1562 = scalar_lea.sflag [#allocation8], %s1561
          %s1563 = sand.u32 %s277, 1
          %s1564 = smul.addr %s1563, 48
          %s1565 = scalar_lea.vmem [#allocation12], %s1564
          %1566 = dma.done %s1562, 768
        $region100: #{tpu_custom_call.1} parent=95 // pred_fallthru
          _
      $region96: #{tpu_custom_call.1} parent=5 // pred_fallthru
        _
    $region6: #{tpu_custom_call.1} parent=1 // loop_footer
      %s27 = sadd.s32 1, %s23
    $region7: #{tpu_custom_call.1} parent=1 // loop_footer_branch
      %22 = sbr.rel target = $region3
    $region8: #{tpu_custom_call.1} parent=1 // loop_exit
      _
    %1567 = vsyncpa [#allocation7], 1
    %s1568 = scalar_lea.sflag [#allocation7], 1
    %1569 = vsyncpa %s1568, 1
    %1570 = vsyncpa [#allocation10], 1
    %1571 = vsyncpa [#allocation8], 1
    %s1572 = scalar_lea.sflag [#allocation8], 1
    %1573 = vsyncpa %s1572, 1

</llo_original>
